<compile_context>
chip_gen: v7x
topology: tpu7x:2x2x1
jax: 0.10.0
libtpu: 0.0.40
codegen_flags: <defaults>
</compile_context>

<pallas_src>
import functools

import numpy as np
import jax
import jax.numpy as jnp
from jax.experimental import pallas as pl
from jax.experimental.pallas import tpu as pltpu


# ----------------------------- in-kernel helpers ----------------------------


def _per_channel_lane_totals(v, C, W):
    """v: (1, W*C) f32 with lane index = w*C + c.  Returns (1, W*C) where every
    lane holds the total over the W width-groups of its channel c (replicated
    per lane, exactly the form needed for per-lane BN scale/bias).
    Uses log2(W) XLU lane-rolls (free slot vs. VPU/MXU); W must be a power of 2."""
    total = W * C
    s = v
    shift = C
    while shift < total:
        s = s + pltpu.roll(s, shift=shift, axis=1)
        shift *= 2
    return s


def _fold_bn_lanes(acc, gamma_lane, beta_lane, *, count, C, W, eps):
    """Training-mode BatchNorm (batch mean, *biased* batch variance) folded into a
    per-lane scale/bias, computed entirely in-kernel from the resident f32 acc."""
    lane_sum = jnp.sum(acc, axis=0, keepdims=True)           # (1, W*C)
    lane_ssq = jnp.sum(acc * acc, axis=0, keepdims=True)     # (1, W*C)
    ch_sum = _per_channel_lane_totals(lane_sum, C, W)
    ch_ssq = _per_channel_lane_totals(lane_ssq, C, W)
    inv_n = 1.0 / count
    mean = ch_sum * inv_n
    # TODO(synk): E[x^2]-E[x]^2 cancels badly for very large N*H*W; switch to a
    # shifted / two-pass variance if these shapes ever grow.
    var = jnp.maximum(ch_ssq * inv_n - mean * mean, 0.0)
    scale = gamma_lane * jax.lax.rsqrt(var + eps)             # EUP rsqrt (free slot)
    shift = beta_lane - mean * scale
    return scale, shift


# ------------------------------- fused kernel -------------------------------


def _double_conv_kernel(x_ref, t1_ref, b1_ref, g1_ref, be1_ref,
                        t2_ref, b2_ref, g2_ref, be2_ref,
                        o_ref, xp1_ref, xp2_ref,
                        *, N, H, W, Cin, Cout, d, pad, eps):
    """Whole DoubleConv in one grid step (whole batch resident in VMEM).

    x_ref  : (N, H, W*Cin)        f32   lane-dense input
    t1_ref : (3, W*Cin, W*Cout)   bf16  block-Toeplitz weight for conv1 (per kh)
    t2_ref : (3, W*Cout, W*Cout)  bf16  block-Toeplitz weight for conv2 (per kh)
    b*_ref : (1, W*Cout)          f32   conv bias, lane-tiled
    g*/be* : (1, W*Cout)          f32   BN gamma/beta, lane-tiled
    o_ref  : (N, H, W*Cout)       f32   lane-dense output
    xp*_ref: (N, pad+H+d, W*C)    bf16  H-halo scratch (interior at aligned `pad`)
    """
    WCi = W * Cin
    WCo = W * Cout
    M = N * H
    count = N * H * W

    # -------- stage 1: dilated 3x3 conv as 3 block-Toeplitz MXU dots --------
    # Zero only the d halo rows the taps actually read; the interior store sits at
    # a sublane-tile-aligned offset and casts to bf16 exactly once.
    xp1_ref[:, pad - d:pad, :] = jnp.zeros((N, d, WCi), xp1_ref.dtype)
    xp1_ref[:, pad + H:pad + H + d, :] = jnp.zeros((N, d, WCi), xp1_ref.dtype)
    xp1_ref[:, pad:pad + H, :] = x_ref[...].astype(xp1_ref.dtype)

    acc1 = jnp.zeros((M, WCo), jnp.float32)
    for kh in range(3):
        r0 = pad + (kh - 1) * d
        lhs = xp1_ref[:, r0:r0 + H, :].reshape(M, WCi)                # bf16
        acc1 = acc1 + jnp.dot(lhs, t1_ref[kh],
                              preferred_element_type=jnp.float32)
    acc1 = acc1 + b1_ref[...]                                         # (1, WCo)

    # BN1 batch stats + fold + ReLU on the resident accumulator (no HBM pass).
    scale1, shift1 = _fold_bn_lanes(acc1, g1_ref[...], be1_ref[...],
                                    count=count, C=Cout, W=W, eps=eps)
    a1 = jnp.maximum(acc1 * scale1 + shift1, 0.0)

    # -------- stage 2: second conv on the activated intermediate ------------
    xp2_ref[:, pad - d:pad, :] = jnp.zeros((N, d, WCo), xp2_ref.dtype)
    xp2_ref[:, pad + H:pad + H + d, :] = jnp.zeros((N, d, WCo), xp2_ref.dtype)
    xp2_ref[:, pad:pad + H, :] = a1.reshape(N, H, WCo).astype(xp2_ref.dtype)

    acc2 = jnp.zeros((M, WCo), jnp.float32)
    for kh in range(3):
        r0 = pad + (kh - 1) * d
        lhs = xp2_ref[:, r0:r0 + H, :].reshape(M, WCo)                # bf16
        acc2 = acc2 + jnp.dot(lhs, t2_ref[kh],
                              preferred_element_type=jnp.float32)
    acc2 = acc2 + b2_ref[...]

    scale2, shift2 = _fold_bn_lanes(acc2, g2_ref[...], be2_ref[...],
                                    count=count, C=Cout, W=W, eps=eps)
    o_ref[...] = jnp.maximum(acc2 * scale2 + shift2,
                             0.0).reshape(N, H, WCo).astype(o_ref.dtype)


# --------------------------- wrapper / weight prep ---------------------------


def _toeplitz_weights(w_hwio, W, d, dtype=jnp.bfloat16):
    """w_hwio: (3, 3, Ci, Co) -> (3, W*Ci, W*Co) block-Toeplitz weights (per kh).
    T[kh][wi*Ci+ci, wo*Co+co] = w[kh, kw, ci, co] iff wi == wo + (kw-1)*d and wi is
    in range; zeros encode the width zero-padding so the kernel needs no W halo."""
    _, _, Ci, Co = w_hwio.shape
    sel = np.zeros((3, W, W), np.float32)
    for kw in range(3):
        off = (kw - 1) * d
        for wo in range(W):
            wi = wo + off
            if 0 <= wi < W:
                sel[kw, wi, wo] = 1.0
    t = jnp.einsum("kab,hkio->haibo", jnp.asarray(sel), w_hwio.astype(jnp.float32))
    return t.reshape(3, W * Ci, W * Co).astype(dtype)


def in_conv_forward(x_nchw, params, d):
    """InConv forward.  x_nchw: (N, Cin, H, W) -> (N, Cout, H, W)."""
    N, Cin, H, W = x_nchw.shape
    Cout = params["w1"].shape[-1]
    WCi, WCo = W * Cin, W * Cout
    assert d >= 1
    assert W > 0 and (W & (W - 1)) == 0, "lane-roll BN reduction assumes power-of-2 W"

    pad = -(-d // 16) * 16          # sublane-tile aligned interior offset (>= d)
    Hp = pad + H + d                # rows [0, pad-d) are never read -> left as-is

    # NCHW -> lane-dense (N, H, W*Cin).  This tiny transpose is noise; everything
    # downstream stays lane-dense (minor dims 64 / 128 for the example shapes).
    x = jnp.transpose(x_nchw, (0, 2, 3, 1)).reshape(N, H, WCi).astype(jnp.float32)

    t1 = _toeplitz_weights(params["w1"], W, d)        # (3, WCi, WCo) bf16
    t2 = _toeplitz_weights(params["w2"], W, d)        # (3, WCo, WCo) bf16

    def lane_tile(v):                                  # per-channel -> per-lane
        return jnp.tile(v, W).reshape(1, -1).astype(jnp.float32)

    b1, g1, be1 = lane_tile(params["b1"]), lane_tile(params["g1"]), lane_tile(params["beta1"])
    b2, g2, be2 = lane_tile(params["b2"]), lane_tile(params["g2"]), lane_tile(params["beta2"])

    kernel = functools.partial(_double_conv_kernel, N=N, H=H, W=W, Cin=Cin,
                               Cout=Cout, d=d, pad=pad, eps=1e-5)

    flops = 2 * N * H * 3 * (WCi * WCo + WCo * WCo)
    bytes_accessed = (N * H * WCi * 4 + N * H * WCo * 4
                      + 3 * (WCi + WCo) * WCo * 2 + 6 * WCo * 4)

    def vec_spec():
        return pl.BlockSpec((1, WCo), lambda i: (0, 0))

    out = pl.pallas_call(
        kernel,
        out_shape=jax.ShapeDtypeStruct((N, H, WCo), jnp.float32),
        grid=(1,),  # whole (tiny) batch in one step: BN batch stats couple it anyway
        in_specs=[
            pl.BlockSpec((N, H, WCi), lambda i: (0, 0, 0)),
            pl.BlockSpec((3, WCi, WCo), lambda i: (0, 0, 0)),
            vec_spec(), vec_spec(), vec_spec(),
            pl.BlockSpec((3, WCo, WCo), lambda i: (0, 0, 0)),
            vec_spec(), vec_spec(), vec_spec(),
        ],
        out_specs=pl.BlockSpec((N, H, WCo), lambda i: (0, 0, 0)),
        scratch_shapes=[pltpu.VMEM((N, Hp, WCi), jnp.bfloat16),
                        pltpu.VMEM((N, Hp, WCo), jnp.bfloat16)],
        compiler_params=pltpu.CompilerParams(dimension_semantics=("arbitrary",)),
        cost_estimate=pl.CostEstimate(flops=flops, transcendentals=2 * WCo,
                                      bytes_accessed=bytes_accessed),
    )(x, t1, b1, g1, be1, t2, b2, g2, be2)

    out = out.reshape(N, H, W, Cout)
    return jnp.transpose(out, (0, 3, 1, 2))           # NHWC -> NCHW like PyTorch


# ------------------------------- params & ref --------------------------------


def init_in_conv_params(key, in_ch, out_ch):
    """Deterministic parameter init (shapes mirror the PyTorch module)."""
    k1, k2 = jax.random.split(key)
    fan1, fan2 = in_ch * 9, out_ch * 9
    w1 = jax.random.normal(k1, (3, 3, in_ch, out_ch), jnp.float32) / jnp.sqrt(fan1)
    w2 = jax.random.normal(k2, (3, 3, out_ch, out_ch), jnp.float32) / jnp.sqrt(fan2)
    return dict(w1=w1, b1=jnp.zeros((out_ch,), jnp.float32),
                g1=jnp.ones((out_ch,), jnp.float32),
                beta1=jnp.zeros((out_ch,), jnp.float32),
                w2=w2, b2=jnp.zeros((out_ch,), jnp.float32),
                g2=jnp.ones((out_ch,), jnp.float32),
                beta2=jnp.zeros((out_ch,), jnp.float32))


def _reference_forward(x_nchw, params, d, eps=1e-5):
    """Pure-JAX f32 reference: conv(dil=d, pad=d) + training-mode BN + ReLU, twice."""
    def conv(x, w, b):
        y = jax.lax.conv_general_dilated(
            x, w, window_strides=(1, 1), padding=((d, d), (d, d)),
            rhs_dilation=(d, d), dimension_numbers=("NCHW", "HWIO", "NCHW"))
        return y + b.reshape(1, -1, 1, 1)

    def bn_relu(y, g, be):
        mean = jnp.mean(y, axis=(0, 2, 3), keepdims=True)
        var = jnp.mean(jnp.square(y - mean), axis=(0, 2, 3), keepdims=True)  # biased
        yn = (y - mean) * jax.lax.rsqrt(var + eps)
        return jnp.maximum(yn * g.reshape(1, -1, 1, 1) + be.reshape(1, -1, 1, 1), 0.0)

    y = bn_relu(conv(x_nchw, params["w1"], params["b1"]), params["g1"], params["beta1"])
    return bn_relu(conv(y, params["w2"], params["b2"]), params["g2"], params["beta2"])


if __name__ == "__main__":
    in_ch, out_ch, d = 4, 8, 2
    N, H, W = 2, 16, 16

    key = jax.random.PRNGKey(0)
    k_x, k_p = jax.random.split(key)
    x = jax.random.normal(k_x, (N, in_ch, H, W), jnp.float32)   # NCHW like PyTorch
    params = init_in_conv_params(k_p, in_ch, out_ch)

    fwd = jax.jit(functools.partial(in_conv_forward, d=d))
    out = jax.block_until_ready(fwd(x, params))

    assert out.shape == (N, out_ch, H, W), out.shape
    assert bool(jnp.all(jnp.isfinite(out)))
    assert bool(jnp.all(out >= 0.0))                 # ReLU output

    # f32 XLA reference; kernel uses bf16 MXU operands so allow ~1e-2-level error.
    ref = _reference_forward(x, params, d)
    max_err = float(jnp.max(jnp.abs(out - ref)))
    assert max_err < 0.15, f"max abs err vs f32 reference: {max_err}"

    print("KERNEL_OK")
</pallas_src>

<mosaic_0001>
module attributes {stable_mosaic.version = 11 : i64} {
  func.func @_double_conv_kernel(%arg0: i32, %arg1: memref<2x16x64xf32, #tpu.memory_space<vmem>>, %arg2: memref<3x64x128xbf16, #tpu.memory_space<vmem>>, %arg3: memref<1x128xf32, #tpu.memory_space<vmem>>, %arg4: memref<1x128xf32, #tpu.memory_space<vmem>>, %arg5: memref<1x128xf32, #tpu.memory_space<vmem>>, %arg6: memref<3x128x128xbf16, #tpu.memory_space<vmem>>, %arg7: memref<1x128xf32, #tpu.memory_space<vmem>>, %arg8: memref<1x128xf32, #tpu.memory_space<vmem>>, %arg9: memref<1x128xf32, #tpu.memory_space<vmem>>, %arg10: memref<2x16x128xf32, #tpu.memory_space<vmem>>, %arg11: memref<2x34x64xbf16, #tpu.memory_space<vmem>>, %arg12: memref<2x34x128xbf16, #tpu.memory_space<vmem>>) attributes {dimension_semantics = [#tpu.dimension_semantics<arbitrary>], iteration_bounds = array<i64: 1>, scalar_prefetch = 0 : i64, scratch_operands = 2 : i64, tpu.core_type = #tpu.core_type<tc>, window_params = [{pipeline_mode = #tpu.pipeline_mode<synchronous>, transform_indices = @transform_0, window_bounds = array<i64: 2, 16, 64>}, {pipeline_mode = #tpu.pipeline_mode<synchronous>, transform_indices = @transform_1, window_bounds = array<i64: 3, 64, 128>}, {pipeline_mode = #tpu.pipeline_mode<synchronous>, transform_indices = @transform_2, window_bounds = array<i64: 1, 128>}, {pipeline_mode = #tpu.pipeline_mode<synchronous>, transform_indices = @transform_3, window_bounds = array<i64: 1, 128>}, {pipeline_mode = #tpu.pipeline_mode<synchronous>, transform_indices = @transform_4, window_bounds = array<i64: 1, 128>}, {pipeline_mode = #tpu.pipeline_mode<synchronous>, transform_indices = @transform_5, window_bounds = array<i64: 3, 128, 128>}, {pipeline_mode = #tpu.pipeline_mode<synchronous>, transform_indices = @transform_6, window_bounds = array<i64: 1, 128>}, {pipeline_mode = #tpu.pipeline_mode<synchronous>, transform_indices = @transform_7, window_bounds = array<i64: 1, 128>}, {pipeline_mode = #tpu.pipeline_mode<synchronous>, transform_indices = @transform_8, window_bounds = array<i64: 1, 128>}, {pipeline_mode = #tpu.pipeline_mode<synchronous>, transform_indices = @transform_9, window_bounds = array<i64: 2, 16, 128>}]} {
    %cst = arith.constant 0.000000e+00 : bf16
    %0 = vector.broadcast %cst : bf16 to vector<2x2x64xbf16>
    %c0 = arith.constant 0 : index
    %c14 = arith.constant 14 : index
    %c0_0 = arith.constant 0 : index
    %1 = vector.load %arg11[%c0, %c14, %c0_0] : memref<2x34x64xbf16, #tpu.memory_space<vmem>>, vector<2x2x64xbf16>
    tpu.vector_store %arg11[%c0, %c14, %c0_0], %0 {strides = array<i32>} : memref<2x34x64xbf16, #tpu.memory_space<vmem>>, vector<2x2x64xbf16>,
    %cst_1 = arith.constant 0.000000e+00 : bf16
    %2 = vector.broadcast %cst_1 : bf16 to vector<2x2x64xbf16>
    %c0_2 = arith.constant 0 : index
    %c32 = arith.constant 32 : index
    %c0_3 = arith.constant 0 : index
    %3 = vector.load %arg11[%c0_2, %c32, %c0_3] : memref<2x34x64xbf16, #tpu.memory_space<vmem>>, vector<2x2x64xbf16>
    tpu.vector_store %arg11[%c0_2, %c32, %c0_3], %2 {strides = array<i32>} : memref<2x34x64xbf16, #tpu.memory_space<vmem>>, vector<2x2x64xbf16>,
    %c0_4 = arith.constant 0 : index
    %c0_5 = arith.constant 0 : index
    %c0_6 = arith.constant 0 : index
    %4 = vector.load %arg1[%c0_4, %c0_5, %c0_6] : memref<2x16x64xf32, #tpu.memory_space<vmem>>, vector<2x16x64xf32>
    %5 = arith.truncf %4 : vector<2x16x64xf32> to vector<2x16x64xbf16>
    %c0_7 = arith.constant 0 : index
    %c16 = arith.constant 16 : index
    %c0_8 = arith.constant 0 : index
    %6 = vector.load %arg11[%c0_7, %c16, %c0_8] : memref<2x34x64xbf16, #tpu.memory_space<vmem>>, vector<2x16x64xbf16>
    tpu.vector_store %arg11[%c0_7, %c16, %c0_8], %5 {strides = array<i32>} : memref<2x34x64xbf16, #tpu.memory_space<vmem>>, vector<2x16x64xbf16>,
    %cst_9 = arith.constant 0.000000e+00 : f32
    %7 = vector.broadcast %cst_9 : f32 to vector<32x128xf32>
    %c0_10 = arith.constant 0 : index
    %c14_11 = arith.constant 14 : index
    %c0_12 = arith.constant 0 : index
    %8 = vector.load %arg11[%c0_10, %c14_11, %c0_12] : memref<2x34x64xbf16, #tpu.memory_space<vmem>>, vector<2x16x64xbf16>
    %9 = vector.shape_cast %8 : vector<2x16x64xbf16> to vector<32x64xbf16>
    %c0_13 = arith.constant 0 : index
    %c0_14 = arith.constant 0 : index
    %c0_15 = arith.constant 0 : index
    %10 = vector.load %arg2[%c0_13, %c0_14, %c0_15] : memref<3x64x128xbf16, #tpu.memory_space<vmem>>, vector<1x64x128xbf16>
    %11 = vector.shape_cast %10 : vector<1x64x128xbf16> to vector<64x128xbf16>
    %cst_16 = arith.constant dense<0.000000e+00> : vector<32x128xf32>
    %12 = tpu.matmul %9, %11, %cst_16 {dimension_numbers = #tpu.dot_dimension_numbers<[1], [0], [0], [1], [0, 0, 1, 1], [], []>} : vector<32x64xbf16>, vector<64x128xbf16>, vector<32x128xf32> -> vector<32x128xf32>
    %13 = arith.addf %7, %12 : vector<32x128xf32>
    %c0_17 = arith.constant 0 : index
    %c16_18 = arith.constant 16 : index
    %c0_19 = arith.constant 0 : index
    %14 = vector.load %arg11[%c0_17, %c16_18, %c0_19] : memref<2x34x64xbf16, #tpu.memory_space<vmem>>, vector<2x16x64xbf16>
    %15 = vector.shape_cast %14 : vector<2x16x64xbf16> to vector<32x64xbf16>
    %c1 = arith.constant 1 : index
    %c0_20 = arith.constant 0 : index
    %c0_21 = arith.constant 0 : index
    %16 = vector.load %arg2[%c1, %c0_20, %c0_21] : memref<3x64x128xbf16, #tpu.memory_space<vmem>>, vector<1x64x128xbf16>
    %17 = vector.shape_cast %16 : vector<1x64x128xbf16> to vector<64x128xbf16>
    %cst_22 = arith.constant dense<0.000000e+00> : vector<32x128xf32>
    %18 = tpu.matmul %15, %17, %cst_22 {dimension_numbers = #tpu.dot_dimension_numbers<[1], [0], [0], [1], [0, 0, 1, 1], [], []>} : vector<32x64xbf16>, vector<64x128xbf16>, vector<32x128xf32> -> vector<32x128xf32>
    %19 = arith.addf %13, %18 : vector<32x128xf32>
    %c0_23 = arith.constant 0 : index
    %c18 = arith.constant 18 : index
    %c0_24 = arith.constant 0 : index
    %20 = vector.load %arg11[%c0_23, %c18, %c0_24] : memref<2x34x64xbf16, #tpu.memory_space<vmem>>, vector<2x16x64xbf16>
    %21 = vector.shape_cast %20 : vector<2x16x64xbf16> to vector<32x64xbf16>
    %c2 = arith.constant 2 : index
    %c0_25 = arith.constant 0 : index
    %c0_26 = arith.constant 0 : index
    %22 = vector.load %arg2[%c2, %c0_25, %c0_26] : memref<3x64x128xbf16, #tpu.memory_space<vmem>>, vector<1x64x128xbf16>
    %23 = vector.shape_cast %22 : vector<1x64x128xbf16> to vector<64x128xbf16>
    %cst_27 = arith.constant dense<0.000000e+00> : vector<32x128xf32>
    %24 = tpu.matmul %21, %23, %cst_27 {dimension_numbers = #tpu.dot_dimension_numbers<[1], [0], [0], [1], [0, 0, 1, 1], [], []>} : vector<32x64xbf16>, vector<64x128xbf16>, vector<32x128xf32> -> vector<32x128xf32>
    %25 = arith.addf %19, %24 : vector<32x128xf32>
    %c0_28 = arith.constant 0 : index
    %c0_29 = arith.constant 0 : index
    %26 = vector.load %arg3[%c0_28, %c0_29] : memref<1x128xf32, #tpu.memory_space<vmem>>, vector<1x128xf32>
    %27 = vector.broadcast %26 : vector<1x128xf32> to vector<32x128xf32>
    %28 = arith.addf %25, %27 : vector<32x128xf32>
    %c0_30 = arith.constant 0 : index
    %c0_31 = arith.constant 0 : index
    %29 = vector.load %arg4[%c0_30, %c0_31] : memref<1x128xf32, #tpu.memory_space<vmem>>, vector<1x128xf32>
    %c0_32 = arith.constant 0 : index
    %c0_33 = arith.constant 0 : index
    %30 = vector.load %arg5[%c0_32, %c0_33] : memref<1x128xf32, #tpu.memory_space<vmem>>, vector<1x128xf32>
    %cst_34 = arith.constant dense<0.000000e+00> : vector<128xf32>
    %31 = vector.multi_reduction <add>, %28, %cst_34 [0] : vector<32x128xf32> to vector<128xf32>
    %32 = vector.shape_cast %31 : vector<128xf32> to vector<1x128xf32>
    %33 = arith.mulf %28, %28 : vector<32x128xf32>
    %cst_35 = arith.constant dense<0.000000e+00> : vector<128xf32>
    %34 = vector.multi_reduction <add>, %33, %cst_35 [0] : vector<32x128xf32> to vector<128xf32>
    %35 = vector.shape_cast %34 : vector<128xf32> to vector<1x128xf32>
    %c8_i32 = arith.constant 8 : i32
    %36 = tpu.dynamic_rotate %32 by %c8_i32 dim 1 : vector<1x128xf32>, i32 -> vector<1x128xf32>
    %37 = arith.addf %32, %36 : vector<1x128xf32>
    %c16_i32 = arith.constant 16 : i32
    %38 = tpu.dynamic_rotate %37 by %c16_i32 dim 1 : vector<1x128xf32>, i32 -> vector<1x128xf32>
    %39 = arith.addf %37, %38 : vector<1x128xf32>
    %c32_i32 = arith.constant 32 : i32
    %40 = tpu.dynamic_rotate %39 by %c32_i32 dim 1 : vector<1x128xf32>, i32 -> vector<1x128xf32>
    %41 = arith.addf %39, %40 : vector<1x128xf32>
    %c64_i32 = arith.constant 64 : i32
    %42 = tpu.dynamic_rotate %41 by %c64_i32 dim 1 : vector<1x128xf32>, i32 -> vector<1x128xf32>
    %43 = arith.addf %41, %42 : vector<1x128xf32>
    %c8_i32_36 = arith.constant 8 : i32
    %44 = tpu.dynamic_rotate %35 by %c8_i32_36 dim 1 : vector<1x128xf32>, i32 -> vector<1x128xf32>
    %45 = arith.addf %35, %44 : vector<1x128xf32>
    %c16_i32_37 = arith.constant 16 : i32
    %46 = tpu.dynamic_rotate %45 by %c16_i32_37 dim 1 : vector<1x128xf32>, i32 -> vector<1x128xf32>
    %47 = arith.addf %45, %46 : vector<1x128xf32>
    %c32_i32_38 = arith.constant 32 : i32
    %48 = tpu.dynamic_rotate %47 by %c32_i32_38 dim 1 : vector<1x128xf32>, i32 -> vector<1x128xf32>
    %49 = arith.addf %47, %48 : vector<1x128xf32>
    %c64_i32_39 = arith.constant 64 : i32
    %50 = tpu.dynamic_rotate %49 by %c64_i32_39 dim 1 : vector<1x128xf32>, i32 -> vector<1x128xf32>
    %51 = arith.addf %49, %50 : vector<1x128xf32>
    %cst_40 = arith.constant 0.001953125 : f32
    %52 = vector.broadcast %cst_40 : f32 to vector<1x128xf32>
    %53 = arith.mulf %43, %52 : vector<1x128xf32>
    %cst_41 = arith.constant 0.001953125 : f32
    %54 = vector.broadcast %cst_41 : f32 to vector<1x128xf32>
    %55 = arith.mulf %51, %54 : vector<1x128xf32>
    %56 = arith.mulf %53, %53 : vector<1x128xf32>
    %57 = arith.subf %55, %56 : vector<1x128xf32>
    %cst_42 = arith.constant 0.000000e+00 : f32
    %58 = vector.broadcast %cst_42 : f32 to vector<1x128xf32>
    %59 = arith.maximumf %57, %58 : vector<1x128xf32>
    %cst_43 = arith.constant 9.99999974E-6 : f32
    %60 = vector.broadcast %cst_43 : f32 to vector<1x128xf32>
    %61 = arith.addf %59, %60 : vector<1x128xf32>
    %62 = math.rsqrt %61 : vector<1x128xf32>
    %63 = arith.mulf %29, %62 : vector<1x128xf32>
    %64 = arith.mulf %53, %63 : vector<1x128xf32>
    %65 = arith.subf %30, %64 : vector<1x128xf32>
    %66 = vector.broadcast %63 : vector<1x128xf32> to vector<32x128xf32>
    %67 = arith.mulf %28, %66 : vector<32x128xf32>
    %68 = vector.broadcast %65 : vector<1x128xf32> to vector<32x128xf32>
    %69 = arith.addf %67, %68 : vector<32x128xf32>
    %cst_44 = arith.constant 0.000000e+00 : f32
    %70 = vector.broadcast %cst_44 : f32 to vector<32x128xf32>
    %71 = arith.maximumf %69, %70 : vector<32x128xf32>
    %cst_45 = arith.constant 0.000000e+00 : bf16
    %72 = vector.broadcast %cst_45 : bf16 to vector<2x2x128xbf16>
    %c0_46 = arith.constant 0 : index
    %c14_47 = arith.constant 14 : index
    %c0_48 = arith.constant 0 : index
    %73 = vector.load %arg12[%c0_46, %c14_47, %c0_48] : memref<2x34x128xbf16, #tpu.memory_space<vmem>>, vector<2x2x128xbf16>
    tpu.vector_store %arg12[%c0_46, %c14_47, %c0_48], %72 {strides = array<i32>} : memref<2x34x128xbf16, #tpu.memory_space<vmem>>, vector<2x2x128xbf16>,
    %cst_49 = arith.constant 0.000000e+00 : bf16
    %74 = vector.broadcast %cst_49 : bf16 to vector<2x2x128xbf16>
    %c0_50 = arith.constant 0 : index
    %c32_51 = arith.constant 32 : index
    %c0_52 = arith.constant 0 : index
    %75 = vector.load %arg12[%c0_50, %c32_51, %c0_52] : memref<2x34x128xbf16, #tpu.memory_space<vmem>>, vector<2x2x128xbf16>
    tpu.vector_store %arg12[%c0_50, %c32_51, %c0_52], %74 {strides = array<i32>} : memref<2x34x128xbf16, #tpu.memory_space<vmem>>, vector<2x2x128xbf16>,
    %76 = vector.shape_cast %71 : vector<32x128xf32> to vector<2x16x128xf32>
    %77 = arith.truncf %76 : vector<2x16x128xf32> to vector<2x16x128xbf16>
    %c0_53 = arith.constant 0 : index
    %c16_54 = arith.constant 16 : index
    %c0_55 = arith.constant 0 : index
    %78 = vector.load %arg12[%c0_53, %c16_54, %c0_55] : memref<2x34x128xbf16, #tpu.memory_space<vmem>>, vector<2x16x128xbf16>
    tpu.vector_store %arg12[%c0_53, %c16_54, %c0_55], %77 {strides = array<i32>} : memref<2x34x128xbf16, #tpu.memory_space<vmem>>, vector<2x16x128xbf16>,
    %cst_56 = arith.constant 0.000000e+00 : f32
    %79 = vector.broadcast %cst_56 : f32 to vector<32x128xf32>
    %c0_57 = arith.constant 0 : index
    %c14_58 = arith.constant 14 : index
    %c0_59 = arith.constant 0 : index
    %80 = vector.load %arg12[%c0_57, %c14_58, %c0_59] : memref<2x34x128xbf16, #tpu.memory_space<vmem>>, vector<2x16x128xbf16>
    %81 = vector.shape_cast %80 : vector<2x16x128xbf16> to vector<32x128xbf16>
    %c0_60 = arith.constant 0 : index
    %c0_61 = arith.constant 0 : index
    %c0_62 = arith.constant 0 : index
    %82 = vector.load %arg6[%c0_60, %c0_61, %c0_62] : memref<3x128x128xbf16, #tpu.memory_space<vmem>>, vector<1x128x128xbf16>
    %83 = vector.shape_cast %82 : vector<1x128x128xbf16> to vector<128x128xbf16>
    %cst_63 = arith.constant dense<0.000000e+00> : vector<32x128xf32>
    %84 = tpu.matmul %81, %83, %cst_63 {dimension_numbers = #tpu.dot_dimension_numbers<[1], [0], [0], [1], [0, 0, 1, 1], [], []>} : vector<32x128xbf16>, vector<128x128xbf16>, vector<32x128xf32> -> vector<32x128xf32>
    %85 = arith.addf %79, %84 : vector<32x128xf32>
    %c0_64 = arith.constant 0 : index
    %c16_65 = arith.constant 16 : index
    %c0_66 = arith.constant 0 : index
    %86 = vector.load %arg12[%c0_64, %c16_65, %c0_66] : memref<2x34x128xbf16, #tpu.memory_space<vmem>>, vector<2x16x128xbf16>
    %87 = vector.shape_cast %86 : vector<2x16x128xbf16> to vector<32x128xbf16>
    %c1_67 = arith.constant 1 : index
    %c0_68 = arith.constant 0 : index
    %c0_69 = arith.constant 0 : index
    %88 = vector.load %arg6[%c1_67, %c0_68, %c0_69] : memref<3x128x128xbf16, #tpu.memory_space<vmem>>, vector<1x128x128xbf16>
    %89 = vector.shape_cast %88 : vector<1x128x128xbf16> to vector<128x128xbf16>
    %cst_70 = arith.constant dense<0.000000e+00> : vector<32x128xf32>
    %90 = tpu.matmul %87, %89, %cst_70 {dimension_numbers = #tpu.dot_dimension_numbers<[1], [0], [0], [1], [0, 0, 1, 1], [], []>} : vector<32x128xbf16>, vector<128x128xbf16>, vector<32x128xf32> -> vector<32x128xf32>
    %91 = arith.addf %85, %90 : vector<32x128xf32>
    %c0_71 = arith.constant 0 : index
    %c18_72 = arith.constant 18 : index
    %c0_73 = arith.constant 0 : index
    %92 = vector.load %arg12[%c0_71, %c18_72, %c0_73] : memref<2x34x128xbf16, #tpu.memory_space<vmem>>, vector<2x16x128xbf16>
    %93 = vector.shape_cast %92 : vector<2x16x128xbf16> to vector<32x128xbf16>
    %c2_74 = arith.constant 2 : index
    %c0_75 = arith.constant 0 : index
    %c0_76 = arith.constant 0 : index
    %94 = vector.load %arg6[%c2_74, %c0_75, %c0_76] : memref<3x128x128xbf16, #tpu.memory_space<vmem>>, vector<1x128x128xbf16>
    %95 = vector.shape_cast %94 : vector<1x128x128xbf16> to vector<128x128xbf16>
    %cst_77 = arith.constant dense<0.000000e+00> : vector<32x128xf32>
    %96 = tpu.matmul %93, %95, %cst_77 {dimension_numbers = #tpu.dot_dimension_numbers<[1], [0], [0], [1], [0, 0, 1, 1], [], []>} : vector<32x128xbf16>, vector<128x128xbf16>, vector<32x128xf32> -> vector<32x128xf32>
    %97 = arith.addf %91, %96 : vector<32x128xf32>
    %c0_78 = arith.constant 0 : index
    %c0_79 = arith.constant 0 : index
    %98 = vector.load %arg7[%c0_78, %c0_79] : memref<1x128xf32, #tpu.memory_space<vmem>>, vector<1x128xf32>
    %99 = vector.broadcast %98 : vector<1x128xf32> to vector<32x128xf32>
    %100 = arith.addf %97, %99 : vector<32x128xf32>
    %c0_80 = arith.constant 0 : index
    %c0_81 = arith.constant 0 : index
    %101 = vector.load %arg8[%c0_80, %c0_81] : memref<1x128xf32, #tpu.memory_space<vmem>>, vector<1x128xf32>
    %c0_82 = arith.constant 0 : index
    %c0_83 = arith.constant 0 : index
    %102 = vector.load %arg9[%c0_82, %c0_83] : memref<1x128xf32, #tpu.memory_space<vmem>>, vector<1x128xf32>
    %cst_84 = arith.constant dense<0.000000e+00> : vector<128xf32>
    %103 = vector.multi_reduction <add>, %100, %cst_84 [0] : vector<32x128xf32> to vector<128xf32>
    %104 = vector.shape_cast %103 : vector<128xf32> to vector<1x128xf32>
    %105 = arith.mulf %100, %100 : vector<32x128xf32>
    %cst_85 = arith.constant dense<0.000000e+00> : vector<128xf32>
    %106 = vector.multi_reduction <add>, %105, %cst_85 [0] : vector<32x128xf32> to vector<128xf32>
    %107 = vector.shape_cast %106 : vector<128xf32> to vector<1x128xf32>
    %c8_i32_86 = arith.constant 8 : i32
    %108 = tpu.dynamic_rotate %104 by %c8_i32_86 dim 1 : vector<1x128xf32>, i32 -> vector<1x128xf32>
    %109 = arith.addf %104, %108 : vector<1x128xf32>
    %c16_i32_87 = arith.constant 16 : i32
    %110 = tpu.dynamic_rotate %109 by %c16_i32_87 dim 1 : vector<1x128xf32>, i32 -> vector<1x128xf32>
    %111 = arith.addf %109, %110 : vector<1x128xf32>
    %c32_i32_88 = arith.constant 32 : i32
    %112 = tpu.dynamic_rotate %111 by %c32_i32_88 dim 1 : vector<1x128xf32>, i32 -> vector<1x128xf32>
    %113 = arith.addf %111, %112 : vector<1x128xf32>
    %c64_i32_89 = arith.constant 64 : i32
    %114 = tpu.dynamic_rotate %113 by %c64_i32_89 dim 1 : vector<1x128xf32>, i32 -> vector<1x128xf32>
    %115 = arith.addf %113, %114 : vector<1x128xf32>
    %c8_i32_90 = arith.constant 8 : i32
    %116 = tpu.dynamic_rotate %107 by %c8_i32_90 dim 1 : vector<1x128xf32>, i32 -> vector<1x128xf32>
    %117 = arith.addf %107, %116 : vector<1x128xf32>
    %c16_i32_91 = arith.constant 16 : i32
    %118 = tpu.dynamic_rotate %117 by %c16_i32_91 dim 1 : vector<1x128xf32>, i32 -> vector<1x128xf32>
    %119 = arith.addf %117, %118 : vector<1x128xf32>
    %c32_i32_92 = arith.constant 32 : i32
    %120 = tpu.dynamic_rotate %119 by %c32_i32_92 dim 1 : vector<1x128xf32>, i32 -> vector<1x128xf32>
    %121 = arith.addf %119, %120 : vector<1x128xf32>
    %c64_i32_93 = arith.constant 64 : i32
    %122 = tpu.dynamic_rotate %121 by %c64_i32_93 dim 1 : vector<1x128xf32>, i32 -> vector<1x128xf32>
    %123 = arith.addf %121, %122 : vector<1x128xf32>
    %cst_94 = arith.constant 0.001953125 : f32
    %124 = vector.broadcast %cst_94 : f32 to vector<1x128xf32>
    %125 = arith.mulf %115, %124 : vector<1x128xf32>
    %cst_95 = arith.constant 0.001953125 : f32
    %126 = vector.broadcast %cst_95 : f32 to vector<1x128xf32>
    %127 = arith.mulf %123, %126 : vector<1x128xf32>
    %128 = arith.mulf %125, %125 : vector<1x128xf32>
    %129 = arith.subf %127, %128 : vector<1x128xf32>
    %cst_96 = arith.constant 0.000000e+00 : f32
    %130 = vector.broadcast %cst_96 : f32 to vector<1x128xf32>
    %131 = arith.maximumf %129, %130 : vector<1x128xf32>
    %cst_97 = arith.constant 9.99999974E-6 : f32
    %132 = vector.broadcast %cst_97 : f32 to vector<1x128xf32>
    %133 = arith.addf %131, %132 : vector<1x128xf32>
    %134 = math.rsqrt %133 : vector<1x128xf32>
    %135 = arith.mulf %101, %134 : vector<1x128xf32>
    %136 = arith.mulf %125, %135 : vector<1x128xf32>
    %137 = arith.subf %102, %136 : vector<1x128xf32>
    %138 = vector.broadcast %135 : vector<1x128xf32> to vector<32x128xf32>
    %139 = arith.mulf %100, %138 : vector<32x128xf32>
    %140 = vector.broadcast %137 : vector<1x128xf32> to vector<32x128xf32>
    %141 = arith.addf %139, %140 : vector<32x128xf32>
    %cst_98 = arith.constant 0.000000e+00 : f32
    %142 = vector.broadcast %cst_98 : f32 to vector<32x128xf32>
    %143 = arith.maximumf %141, %142 : vector<32x128xf32>
    %144 = vector.shape_cast %143 : vector<32x128xf32> to vector<2x16x128xf32>
    %c0_99 = arith.constant 0 : index
    %c0_100 = arith.constant 0 : index
    %c0_101 = arith.constant 0 : index
    %145 = vector.load %arg10[%c0_99, %c0_100, %c0_101] : memref<2x16x128xf32, #tpu.memory_space<vmem>>, vector<2x16x128xf32>
    tpu.vector_store %arg10[%c0_99, %c0_100, %c0_101], %144 {strides = array<i32>} : memref<2x16x128xf32, #tpu.memory_space<vmem>>, vector<2x16x128xf32>,
    return
  }
  func.func @transform_0(%arg0: i32) -> (i32, i32, i32) {
    %c0_i32 = arith.constant 0 : i32
    %c0_i32_0 = arith.constant 0 : i32
    %c0_i32_1 = arith.constant 0 : i32
    %c0_i32_2 = arith.constant 0 : i32
    return %c0_i32, %c0_i32_0, %c0_i32_1 : i32, i32, i32
  }
  func.func @transform_1(%arg0: i32) -> (i32, i32, i32) {
    %c0_i32 = arith.constant 0 : i32
    %c0_i32_0 = arith.constant 0 : i32
    %c0_i32_1 = arith.constant 0 : i32
    %c0_i32_2 = arith.constant 0 : i32
    return %c0_i32, %c0_i32_0, %c0_i32_1 : i32, i32, i32
  }
  func.func @transform_2(%arg0: i32) -> (i32, i32) {
    %c0_i32 = arith.constant 0 : i32
    %c0_i32_0 = arith.constant 0 : i32
    %c0_i32_1 = arith.constant 0 : i32
    return %c0_i32, %c0_i32_0 : i32, i32
  }
  func.func @transform_3(%arg0: i32) -> (i32, i32) {
    %c0_i32 = arith.constant 0 : i32
    %c0_i32_0 = arith.constant 0 : i32
    %c0_i32_1 = arith.constant 0 : i32
    return %c0_i32, %c0_i32_0 : i32, i32
  }
  func.func @transform_4(%arg0: i32) -> (i32, i32) {
    %c0_i32 = arith.constant 0 : i32
    %c0_i32_0 = arith.constant 0 : i32
    %c0_i32_1 = arith.constant 0 : i32
    return %c0_i32, %c0_i32_0 : i32, i32
  }
  func.func @transform_5(%arg0: i32) -> (i32, i32, i32) {
    %c0_i32 = arith.constant 0 : i32
    %c0_i32_0 = arith.constant 0 : i32
    %c0_i32_1 = arith.constant 0 : i32
    %c0_i32_2 = arith.constant 0 : i32
    return %c0_i32, %c0_i32_0, %c0_i32_1 : i32, i32, i32
  }
  func.func @transform_6(%arg0: i32) -> (i32, i32) {
    %c0_i32 = arith.constant 0 : i32
    %c0_i32_0 = arith.constant 0 : i32
    %c0_i32_1 = arith.constant 0 : i32
    return %c0_i32, %c0_i32_0 : i32, i32
  }
  func.func @transform_7(%arg0: i32) -> (i32, i32) {
    %c0_i32 = arith.constant 0 : i32
    %c0_i32_0 = arith.constant 0 : i32
    %c0_i32_1 = arith.constant 0 : i32
    return %c0_i32, %c0_i32_0 : i32, i32
  }
  func.func @transform_8(%arg0: i32) -> (i32, i32) {
    %c0_i32 = arith.constant 0 : i32
    %c0_i32_0 = arith.constant 0 : i32
    %c0_i32_1 = arith.constant 0 : i32
    return %c0_i32, %c0_i32_0 : i32, i32
  }
  func.func @transform_9(%arg0: i32) -> (i32, i32, i32) {
    %c0_i32 = arith.constant 0 : i32
    %c0_i32_0 = arith.constant 0 : i32
    %c0_i32_1 = arith.constant 0 : i32
    %c0_i32_2 = arith.constant 0 : i32
    return %c0_i32, %c0_i32_0, %c0_i32_1 : i32, i32, i32
  }
}

</mosaic_0001>

<llo_original>
// kernel: tile.33
$region0: #{tile.33}
  #allocation0 [shape = 's32[1]{0}', space=sflag, size = 0x4, scoped, tag = 'scoped memory for tile.33']
  %s0 = inlined_call_operand.vmem [shape: f32[8], index: 0, kind: input, shape index: {}]
  %s1 = inlined_call_operand.vmem [shape: f32[16,8], index: 1, kind: output, shape index: {}]
  // Predicated region
  $region2: #{tile.33} parent=0 // pred_check
    _
  $region3: #{tile.33} parent=0 // pred_check_branch
    %3 = sbr.rel (0) target = $region5
  $region4: #{tile.33} parent=0 // pred_region
    _
  $region5: #{tile.33} parent=0 // pred_fallthru
    _
  %v4 = vld [vmem:[%s0] ss:$0 sm:$0xff]
  %5 = vst [vmem:[%s1] sm:$0xff] %v4
  %s6 = scalar_lea.vmem %s1, 8
  %7 = vst [vmem:[%s6] sm:$0xff] %v4

// kernel: tile.34
$region0: #{tile.34}
  %s0 = inlined_call_operand.vmem [shape: f32[16,8], index: 0, kind: input, shape index: {}]
  %s1 = inlined_call_operand.vmem [shape: f32[1,128], index: 1, kind: output, shape index: {}]
  $region1: #{tile.34} parent=0
    #allocation0 [shape = 'u8[4096]{0}', space=vmem, size = 0x1000, scoped, tag = 'scoped mem for output reshape']
    %v2 = vld [vmem:[%s0] sm:$0x1]
    %vm3 = vcmask 64512
    %4 = vst.msk [vmem:[#allocation0] sm:$0x1] %vm3, %v2
    %s5 = scalar_lea.vmem %s0, 15
    %v6 = vld [vmem:[%s5] sm:$0x1]
    %7 = vrot.lane.b32.xlu0 %v6, 120
    %v8 = vpop.permute.xlu0 %7
    %vm9 = vcmask 1048512
    %10 = vst.msk [vmem:[#allocation0] sm:$0x1] %vm9, %v8
    %s11 = scalar_lea.vmem %s0, 14
    %v12 = vld [vmem:[%s11] sm:$0x1]
    %13 = vrot.lane.b32.xlu0 %v12, 112
    %v14 = vpop.permute.xlu0 %13
    %vm15 = vcmask 982912
    %16 = vst.msk [vmem:[#allocation0] sm:$0x1] %vm15, %v14
    %s17 = scalar_lea.vmem %s0, 13
    %v18 = vld [vmem:[%s17] sm:$0x1]
    %19 = vrot.lane.b32.xlu0 %v18, 104
    %v20 = vpop.permute.xlu0 %19
    %vm21 = vcmask 917312
    %22 = vst.msk [vmem:[#allocation0] sm:$0x1] %vm21, %v20
    %s23 = scalar_lea.vmem %s0, 12
    %v24 = vld [vmem:[%s23] sm:$0x1]
    %25 = vrot.lane.b32.xlu0 %v24, 96
    %v26 = vpop.permute.xlu0 %25
    %vm27 = vcmask 851712
    %28 = vst.msk [vmem:[#allocation0] sm:$0x1] %vm27, %v26
    %s29 = scalar_lea.vmem %s0, 11
    %v30 = vld [vmem:[%s29] sm:$0x1]
    %31 = vrot.lane.b32.xlu0 %v30, 88
    %v32 = vpop.permute.xlu0 %31
    %vm33 = vcmask 786112
    %34 = vst.msk [vmem:[#allocation0] sm:$0x1] %vm33, %v32
    %s35 = scalar_lea.vmem %s0, 10
    %v36 = vld [vmem:[%s35] sm:$0x1]
    %37 = vrot.lane.b32.xlu0 %v36, 80
    %v38 = vpop.permute.xlu0 %37
    %vm39 = vcmask 720512
    %40 = vst.msk [vmem:[#allocation0] sm:$0x1] %vm39, %v38
    %s41 = scalar_lea.vmem %s0, 9
    %v42 = vld [vmem:[%s41] sm:$0x1]
    %43 = vrot.lane.b32.xlu0 %v42, 72
    %v44 = vpop.permute.xlu0 %43
    %vm45 = vcmask 654912
    %46 = vst.msk [vmem:[#allocation0] sm:$0x1] %vm45, %v44
    %s47 = scalar_lea.vmem %s0, 8
    %v48 = vld [vmem:[%s47] sm:$0x1]
    %49 = vrot.lane.b32.xlu0 %v48, 64
    %v50 = vpop.permute.xlu0 %49
    %vm51 = vcmask 589312
    %52 = vst.msk [vmem:[#allocation0] sm:$0x1] %vm51, %v50
    %s53 = scalar_lea.vmem %s0, 7
    %v54 = vld [vmem:[%s53] sm:$0x1]
    %55 = vrot.lane.b32.xlu0 %v54, 56
    %v56 = vpop.permute.xlu0 %55
    %vm57 = vcmask 523712
    %58 = vst.msk [vmem:[#allocation0] sm:$0x1] %vm57, %v56
    %s59 = scalar_lea.vmem %s0, 6
    %v60 = vld [vmem:[%s59] sm:$0x1]
    %61 = vrot.lane.b32.xlu0 %v60, 48
    %v62 = vpop.permute.xlu0 %61
    %vm63 = vcmask 458112
    %64 = vst.msk [vmem:[#allocation0] sm:$0x1] %vm63, %v62
    %s65 = scalar_lea.vmem %s0, 5
    %v66 = vld [vmem:[%s65] sm:$0x1]
    %67 = vrot.lane.b32.xlu0 %v66, 40
    %v68 = vpop.permute.xlu0 %67
    %vm69 = vcmask 392512
    %70 = vst.msk [vmem:[#allocation0] sm:$0x1] %vm69, %v68
    %s71 = scalar_lea.vmem %s0, 4
    %v72 = vld [vmem:[%s71] sm:$0x1]
    %73 = vrot.lane.b32.xlu0 %v72, 32
    %v74 = vpop.permute.xlu0 %73
    %vm75 = vcmask 326912
    %76 = vst.msk [vmem:[#allocation0] sm:$0x1] %vm75, %v74
    %s77 = scalar_lea.vmem %s0, 3
    %v78 = vld [vmem:[%s77] sm:$0x1]
    %79 = vrot.lane.b32.xlu0 %v78, 24
    %v80 = vpop.permute.xlu0 %79
    %vm81 = vcmask 261312
    %82 = vst.msk [vmem:[#allocation0] sm:$0x1] %vm81, %v80
    %s83 = scalar_lea.vmem %s0, 2
    %v84 = vld [vmem:[%s83] sm:$0x1]
    %85 = vrot.lane.b32.xlu0 %v84, 16
    %v86 = vpop.permute.xlu0 %85
    %vm87 = vcmask 195712
    %88 = vst.msk [vmem:[#allocation0] sm:$0x1] %vm87, %v86
    %s89 = scalar_lea.vmem %s0, 1
    %v90 = vld [vmem:[%s89] sm:$0x1]
    %91 = vrot.lane.b32.xlu0 %v90, 8
    %v92 = vpop.permute.xlu0 %91
    %vm93 = vcmask 130112
    %94 = vst.msk [vmem:[#allocation0] sm:$0x1] %vm93, %v92
    %s96 = sshllo.u32 0, 1
    %v98 = vld [vmem:[#allocation0] sm:%s96]
    %s99 = sshllo.u32 0, 1
    %100 = vst [vmem:[%s1] sm:%s99] %v98

// kernel: in_conv_forward.1
$region0: #{in_conv_forward.1}
  #allocation0 [shape = 'u32[]', space=smem, size = 0x4, offset = 0x4, fixed_abs, tag = 'smem constant byte address 0x4 - core index']
  #allocation1 [shape = 'u32[144,128]{1,0:T(1,128)}', space=vmem, size = 0x12000, scoped, tag = 'internal scratch']
  #allocation2 [shape = 'bf16[2,34,64]{2,1,0:T(8,128)(2,1)}', space=vmem, size = 0x5000, scoped, tag = 'scratch operand']
  #allocation3 [shape = 'bf16[2,34,128]{2,1,0:T(8,128)(2,1)}', space=vmem, size = 0x5000, scoped, tag = 'scratch operand']
  %s0 = inlined_call_operand.vmem [shape: f32[2,16,64], index: 0, kind: input, shape index: {}]
  %s1 = inlined_call_operand.vmem [shape: bf16[3,64,128], index: 1, kind: input, shape index: {}]
  %s2 = inlined_call_operand.vmem [shape: f32[1,128], index: 2, kind: input, shape index: {}]
  %s3 = inlined_call_operand.vmem [shape: f32[1,128], index: 3, kind: input, shape index: {}]
  %s4 = inlined_call_operand.vmem [shape: f32[1,128], index: 4, kind: input, shape index: {}]
  %s5 = inlined_call_operand.vmem [shape: bf16[3,128,128], index: 5, kind: input, shape index: {}]
  %s6 = inlined_call_operand.vmem [shape: f32[1,128], index: 6, kind: input, shape index: {}]
  %s7 = inlined_call_operand.vmem [shape: f32[1,128], index: 7, kind: input, shape index: {}]
  %s8 = inlined_call_operand.vmem [shape: f32[1,128], index: 8, kind: input, shape index: {}]
  %s9 = inlined_call_operand.vmem [shape: f32[2,16,128], index: 9, kind: output, shape index: {}]
  %s10 = sld [smem:[#allocation0]]
  $region46: #{in_conv_forward.1} parent=0
    _
  %s12 = ssub.s32 1, %s10
  %s13 = scalar_select 0, %s12, %s10
  // Predicated region
  $region2: #{in_conv_forward.1} parent=0 // pred_check
    _
  $region3: #{in_conv_forward.1} parent=0 // pred_check_branch
    %15 = sbr.rel (0) target = $region5
  $region4: #{in_conv_forward.1} parent=0 // pred_region
    _
  $region5: #{in_conv_forward.1} parent=0 // pred_fallthru
    _
  // Predicated region
  $region6: #{in_conv_forward.1} parent=0 // pred_check
    _
  $region7: #{in_conv_forward.1} parent=0 // pred_check_branch
    %17 = sbr.rel (0) target = $region9
  $region8: #{in_conv_forward.1} parent=0 // pred_region
    _
  $region9: #{in_conv_forward.1} parent=0 // pred_fallthru
    _
  // Predicated region
  $region10: #{in_conv_forward.1} parent=0 // pred_check
    _
  $region11: #{in_conv_forward.1} parent=0 // pred_check_branch
    %19 = sbr.rel (0) target = $region13
  $region12: #{in_conv_forward.1} parent=0 // pred_region
    _
  $region13: #{in_conv_forward.1} parent=0 // pred_fallthru
    _
  // Predicated region
  $region14: #{in_conv_forward.1} parent=0 // pred_check
    _
  $region15: #{in_conv_forward.1} parent=0 // pred_check_branch
    %21 = sbr.rel (0) target = $region17
  $region16: #{in_conv_forward.1} parent=0 // pred_region
    _
  $region17: #{in_conv_forward.1} parent=0 // pred_fallthru
    _
  // Predicated region
  $region18: #{in_conv_forward.1} parent=0 // pred_check
    _
  $region19: #{in_conv_forward.1} parent=0 // pred_check_branch
    %23 = sbr.rel (0) target = $region21
  $region20: #{in_conv_forward.1} parent=0 // pred_region
    _
  $region21: #{in_conv_forward.1} parent=0 // pred_fallthru
    _
  // Predicated region
  $region22: #{in_conv_forward.1} parent=0 // pred_check
    _
  $region23: #{in_conv_forward.1} parent=0 // pred_check_branch
    %25 = sbr.rel (0) target = $region25
  $region24: #{in_conv_forward.1} parent=0 // pred_region
    _
  $region25: #{in_conv_forward.1} parent=0 // pred_fallthru
    _
  // Predicated region
  $region26: #{in_conv_forward.1} parent=0 // pred_check
    _
  $region27: #{in_conv_forward.1} parent=0 // pred_check_branch
    %27 = sbr.rel (0) target = $region29
  $region28: #{in_conv_forward.1} parent=0 // pred_region
    _
  $region29: #{in_conv_forward.1} parent=0 // pred_fallthru
    _
  // Predicated region
  $region30: #{in_conv_forward.1} parent=0 // pred_check
    _
  $region31: #{in_conv_forward.1} parent=0 // pred_check_branch
    %29 = sbr.rel (0) target = $region33
  $region32: #{in_conv_forward.1} parent=0 // pred_region
    _
  $region33: #{in_conv_forward.1} parent=0 // pred_fallthru
    _
  // Predicated region
  $region34: #{in_conv_forward.1} parent=0 // pred_check
    _
  $region35: #{in_conv_forward.1} parent=0 // pred_check_branch
    %31 = sbr.rel (0) target = $region37
  $region36: #{in_conv_forward.1} parent=0 // pred_region
    _
  $region37: #{in_conv_forward.1} parent=0 // pred_fallthru
    _
  %vm33 = vcmask 519171
  %34 = vst.msk [vmem:[#allocation2 + $0x4] sm:$0x8] %vm33, 0
  %35 = vst.msk [vmem:[#allocation2 + $0x18] sm:$0x8] %vm33, 0
  %vm36 = vcmask 516096
  %37 = vst.msk [vmem:[#allocation2 + $0x10] sm:$0x1] %vm36, 0
  %38 = vst.msk [vmem:[#allocation2 + $0x24] sm:$0x1] %vm36, 0
  %v39 = vld [vmem:[%s0] sm:$0xff]
  %v40 = vld [vmem:[%s0 + $0x8] sm:$0xff]
  %v41 = vld [vmem:[%s0 + $0x10] sm:$0xff]
  %v42 = vld [vmem:[%s0 + $0x18] sm:$0xff]
  %v43 = vpack.c.bf16 %v40, %v39
  %v44 = vpack.c.bf16 %v42, %v41
  %v47 = vunpack.c.l.b16 %v43
  %v48 = vunpack.c.h.b16 %v43
  %v49 = vunpack.c.l.b16 %v44
  %v50 = vunpack.c.h.b16 %v44
  %v51 = vpack.c.b16 %v47, %v47
  %v52 = vpack.c.b16 %v48, %v48
  %v53 = vpack.c.b16 %v49, %v49
  %v54 = vpack.c.b16 %v50, %v50
  %vm59 = vcmask 519168
  %60 = vst.msk [vmem:[#allocation2 + $0x8] sm:$0xf] %vm59, %v51
  %61 = vst.msk [vmem:[#allocation2 + $0xc] sm:$0xf] %vm59, %v52
  %62 = vst.msk [vmem:[#allocation2 + $0x1c] sm:$0xf] %vm59, %v53
  %63 = vst.msk [vmem:[#allocation2 + $0x20] sm:$0xf] %vm59, %v54
  %v64 = vld [vmem:[#allocation2 + $0x4] sm:$0x8]
  %v65 = vld [vmem:[#allocation2 + $0x8] sm:$0xf]
  %v66 = vld [vmem:[#allocation2 + $0xc] sm:$0x7]
  %v67 = vld [vmem:[#allocation2 + $0x18] sm:$0x8]
  %v68 = vld [vmem:[#allocation2 + $0x1c] sm:$0xf]
  %v69 = vld [vmem:[#allocation2 + $0x20] sm:$0x7]
  %vm76 = vcmask 1040384
  %vm77 = vcmask 1044484
  %vm78 = vmor %vm76, %vm77
  %v79 = vrot.slane %v64, 7
  %v80 = vrot.slane %v79, 4
  %v81 = vrot.slane %v65, 7
  %v82 = vsel %vm78, %v80, %v81
  %v83 = vrot.slane %v81, 4
  %v84 = vrot.slane %v66, 7
  %v85 = vsel %vm78, %v83, %v84
  %v86 = vrot.slane %v67, 7
  %v87 = vrot.slane %v86, 4
  %v88 = vrot.slane %v68, 7
  %v89 = vsel %vm78, %v87, %v88
  %v90 = vrot.slane %v88, 4
  %v91 = vrot.slane %v69, 7
  %v92 = vsel %vm78, %v90, %v91
  %v93 = vld [vmem:[%s1] sm:$0xf]
  %v94 = vld [vmem:[%s1 + $0x4] sm:$0xf]
  %v95 = vld [vmem:[%s1 + $0x8] sm:$0xf]
  %v96 = vld [vmem:[%s1 + $0xc] sm:$0xf]
  %v97 = vld [vmem:[%s1 + $0x10] sm:$0xf]
  %v98 = vld [vmem:[%s1 + $0x14] sm:$0xf]
  %v99 = vld [vmem:[%s1 + $0x18] sm:$0xf]
  %v100 = vld [vmem:[%s1 + $0x1c] sm:$0xf]
  %v101 = vld [vmem:[#allocation2 + $0xc] sm:$0xf]
  %v102 = vld [vmem:[#allocation2 + $0x20] sm:$0xf]
  %s103 = scalar_lea.vmem %s1, 32
  %v104 = vld [vmem:[%s103] sm:$0xf]
  %v105 = vld [vmem:[%s103 + $0x4] sm:$0xf]
  %v106 = vld [vmem:[%s103 + $0x8] sm:$0xf]
  %v107 = vld [vmem:[%s103 + $0xc] sm:$0xf]
  %v108 = vld [vmem:[%s103 + $0x10] sm:$0xf]
  %v109 = vld [vmem:[%s103 + $0x14] sm:$0xf]
  %v110 = vld [vmem:[%s103 + $0x18] sm:$0xf]
  %v111 = vld [vmem:[%s103 + $0x1c] sm:$0xf]
  %v114 = vunpack.c.l.b16 %v65
  %v115 = vunpack.c.l.b16 %v101
  %v116 = vunpack.c.l.b16 %v68
  %v117 = vunpack.c.l.b16 %v102
  %v118 = vpack.c.b16 %v115, %v114
  %v119 = vpack.c.b16 %v117, %v116
  %v128 = vunpack.c.l.b16 %v104
  %v129 = vunpack.c.l.b16 %v105
  %v130 = vunpack.c.l.b16 %v106
  %v131 = vunpack.c.l.b16 %v107
  %v132 = vunpack.c.l.b16 %v108
  %v133 = vunpack.c.l.b16 %v109
  %v134 = vunpack.c.l.b16 %v110
  %v135 = vunpack.c.l.b16 %v111
  %v136 = vpack.c.b16 %v129, %v128
  %v137 = vpack.c.b16 %v131, %v130
  %v138 = vpack.c.b16 %v133, %v132
  %v139 = vpack.c.b16 %v135, %v134
  %vm144 = vcmask 523264
  %v146 = vsel %vm144, %v118, 0
  %v149 = vsel %vm144, %v119, 0
  %151 = vmatprep.subr.bf16.mxu0 0
  %152 = vmatpush1.bf16.msra.mxu0 %v136
  %153 = vmatprep.subr.bf16.mxu0 0
  %154 = vmatpush1.bf16.msra.mxu0 %v137
  %155 = vmatprep.subr.bf16.mxu0 0
  %156 = vmatpush1.bf16.msra.mxu0 %v138
  %157 = vmatprep.subr.bf16.mxu0 0
  %158 = vmatpush1.bf16.msra.mxu0 %v139
  %159 = vmatprep.subr.bf16.mxu0 0
  %160 = vmatpush1.bf16.msra.mxu0 0
  %161 = vmatprep.subr.bf16.mxu0 0
  %162 = vmatpush1.bf16.msra.mxu0 0
  %163 = vmatprep.subr.bf16.mxu0 0
  %164 = vmatpush1.bf16.msra.mxu0 0
  %165 = vmatprep.subr.bf16.mxu0 0
  %166 = vmatpush1.bf16.msra.mxu0 0
  %167 = vmatprep.subr.bf16.mxu0 0
  %168 = vmatpush1.bf16.msra.mxu0 0
  %169 = vmatprep.subr.bf16.mxu0 0
  %170 = vmatpush1.bf16.msra.mxu0 0
  %171 = vmatprep.subr.bf16.mxu0 0
  %172 = vmatpush1.bf16.msra.mxu0 0
  %173 = vmatprep.subr.bf16.mxu0 0
  %174 = vmatpush1.bf16.msra.mxu0 0
  %175 = vmatprep.subr.bf16.mxu0 0
  %176 = vmatpush1.bf16.msra.mxu0 0
  %177 = vmatprep.subr.bf16.mxu0 0
  %178 = vmatpush1.bf16.msra.mxu0 0
  %179 = vmatprep.subr.bf16.mxu0 0
  %180 = vmatpush1.bf16.msra.mxu0 0
  %181 = vmatprep.subr.bf16.mxu0 0
  %182 = vmatpush1.bf16.msra.mxu0 0
  %183 = vmatprep.mubr.bf16.mxu0 0
  %184 = vmatmul.mubr.bf16.gmra.mrb[0].mxu0 %v146
  %v185 = vpop.f32.mrb[0].mxu0
  %v186 = vadd.f32 0.0, %v185
  %v187 = vpop.f32.mrb[0].mxu0
  %v188 = vpop.f32.mrb[0].mxu0
  %v189 = vadd.f32 0.0, %v188
  %v190 = vpop.f32.mrb[0].mxu0
  %191 = vmatprep.mubr.bf16.mxu0 0
  %192 = vmatmul.mubr.bf16.gmra.mrb[0].mxu0 %v149
  %v193 = vpop.f32.mrb[0].mxu0
  %v194 = vadd.f32 0.0, %v193
  %v195 = vpop.f32.mrb[0].mxu0
  %v196 = vpop.f32.mrb[0].mxu0
  %v197 = vadd.f32 0.0, %v196
  %v198 = vpop.f32.mrb[0].mxu0
  %199 = vdwg.mxu0
  %v200 = vunpack.c.l.b16 %v82
  %v201 = vunpack.c.l.b16 %v85
  %v202 = vunpack.c.l.b16 %v89
  %v203 = vunpack.c.l.b16 %v92
  %v204 = vpack.c.b16 %v201, %v200
  %v205 = vpack.c.b16 %v203, %v202
  %v214 = vunpack.c.l.b16 %v93
  %v215 = vunpack.c.l.b16 %v94
  %v216 = vunpack.c.l.b16 %v95
  %v217 = vunpack.c.l.b16 %v96
  %v218 = vunpack.c.l.b16 %v97
  %v219 = vunpack.c.l.b16 %v98
  %v220 = vunpack.c.l.b16 %v99
  %v221 = vunpack.c.l.b16 %v100
  %v222 = vpack.c.b16 %v215, %v214
  %v223 = vpack.c.b16 %v217, %v216
  %v224 = vpack.c.b16 %v219, %v218
  %v225 = vpack.c.b16 %v221, %v220
  %v231 = vsel %vm144, %v204, 0
  %v234 = vsel %vm144, %v205, 0
  %236 = vmatprep.subr.bf16.mxu0 0
  %237 = vmatpush1.bf16.msra.mxu0 %v222
  %238 = vmatprep.subr.bf16.mxu0 0
  %239 = vmatpush1.bf16.msra.mxu0 %v223
  %240 = vmatprep.subr.bf16.mxu0 0
  %241 = vmatpush1.bf16.msra.mxu0 %v224
  %242 = vmatprep.subr.bf16.mxu0 0
  %243 = vmatpush1.bf16.msra.mxu0 %v225
  %244 = vmatprep.subr.bf16.mxu0 0
  %245 = vmatpush1.bf16.msra.mxu0 0
  %246 = vmatprep.subr.bf16.mxu0 0
  %247 = vmatpush1.bf16.msra.mxu0 0
  %248 = vmatprep.subr.bf16.mxu0 0
  %249 = vmatpush1.bf16.msra.mxu0 0
  %250 = vmatprep.subr.bf16.mxu0 0
  %251 = vmatpush1.bf16.msra.mxu0 0
  %252 = vmatprep.subr.bf16.mxu0 0
  %253 = vmatpush1.bf16.msra.mxu0 0
  %254 = vmatprep.subr.bf16.mxu0 0
  %255 = vmatpush1.bf16.msra.mxu0 0
  %256 = vmatprep.subr.bf16.mxu0 0
  %257 = vmatpush1.bf16.msra.mxu0 0
  %258 = vmatprep.subr.bf16.mxu0 0
  %259 = vmatpush1.bf16.msra.mxu0 0
  %260 = vmatprep.subr.bf16.mxu0 0
  %261 = vmatpush1.bf16.msra.mxu0 0
  %262 = vmatprep.subr.bf16.mxu0 0
  %263 = vmatpush1.bf16.msra.mxu0 0
  %264 = vmatprep.subr.bf16.mxu0 0
  %265 = vmatpush1.bf16.msra.mxu0 0
  %266 = vmatprep.subr.bf16.mxu0 0
  %267 = vmatpush1.bf16.msra.mxu0 0
  %268 = vmatprep.mubr.bf16.mxu0 0
  %269 = vmatmul.mubr.bf16.gmra.mrb[0].mxu0 %v231
  %v270 = vpop.f32.mrb[0].mxu0
  %v271 = vadd.f32 %v186, %v270
  %v272 = vpop.f32.mrb[0].mxu0
  %v273 = vpop.f32.mrb[0].mxu0
  %v274 = vadd.f32 %v189, %v273
  %v275 = vpop.f32.mrb[0].mxu0
  %276 = vmatprep.mubr.bf16.mxu0 0
  %277 = vmatmul.mubr.bf16.gmra.mrb[0].mxu0 %v234
  %v278 = vpop.f32.mrb[0].mxu0
  %v279 = vadd.f32 %v194, %v278
  %v280 = vpop.f32.mrb[0].mxu0
  %v281 = vpop.f32.mrb[0].mxu0
  %v282 = vadd.f32 %v197, %v281
  %v283 = vpop.f32.mrb[0].mxu0
  %284 = vdwg.mxu0
  %v285 = vld [vmem:[#allocation2 + $0x8] sm:$0xe]
  %v286 = vld [vmem:[#allocation2 + $0xc] sm:$0xf]
  %v287 = vld [vmem:[#allocation2 + $0x10] sm:$0x1]
  %v288 = vld [vmem:[#allocation2 + $0x1c] sm:$0xe]
  %v289 = vld [vmem:[#allocation2 + $0x20] sm:$0xf]
  %v290 = vld [vmem:[#allocation2 + $0x24] sm:$0x1]
  %vm297 = vcmask 1042432
  %vm298 = vcmask 1046532
  %vm299 = vmor %vm297, %vm298
  %v300 = vrot.slane %v285, 5
  %v301 = vrot.slane %v300, 4
  %v302 = vrot.slane %v286, 5
  %v303 = vsel %vm299, %v301, %v302
  %v304 = vrot.slane %v302, 4
  %v305 = vrot.slane %v287, 5
  %v306 = vsel %vm299, %v304, %v305
  %v307 = vrot.slane %v288, 5
  %v308 = vrot.slane %v307, 4
  %v309 = vrot.slane %v289, 5
  %v310 = vsel %vm299, %v308, %v309
  %v311 = vrot.slane %v309, 4
  %v312 = vrot.slane %v290, 5
  %v313 = vsel %vm299, %v311, %v312
  %s314 = scalar_lea.vmem %s1, 64
  %v315 = vld [vmem:[%s314] sm:$0xf]
  %v316 = vld [vmem:[%s314 + $0x4] sm:$0xf]
  %v317 = vld [vmem:[%s314 + $0x8] sm:$0xf]
  %v318 = vld [vmem:[%s314 + $0xc] sm:$0xf]
  %v319 = vld [vmem:[%s314 + $0x10] sm:$0xf]
  %v320 = vld [vmem:[%s314 + $0x14] sm:$0xf]
  %v321 = vld [vmem:[%s314 + $0x18] sm:$0xf]
  %v322 = vld [vmem:[%s314 + $0x1c] sm:$0xf]
  %v323 = vunpack.c.l.b16 %v303
  %v324 = vunpack.c.l.b16 %v306
  %v325 = vunpack.c.l.b16 %v310
  %v326 = vunpack.c.l.b16 %v313
  %v327 = vpack.c.b16 %v324, %v323
  %v328 = vpack.c.b16 %v326, %v325
  %v337 = vunpack.c.l.b16 %v315
  %v338 = vunpack.c.l.b16 %v316
  %v339 = vunpack.c.l.b16 %v317
  %v340 = vunpack.c.l.b16 %v318
  %v341 = vunpack.c.l.b16 %v319
  %v342 = vunpack.c.l.b16 %v320
  %v343 = vunpack.c.l.b16 %v321
  %v344 = vunpack.c.l.b16 %v322
  %v345 = vpack.c.b16 %v338, %v337
  %v346 = vpack.c.b16 %v340, %v339
  %v347 = vpack.c.b16 %v342, %v341
  %v348 = vpack.c.b16 %v344, %v343
  %v354 = vsel %vm144, %v327, 0
  %v357 = vsel %vm144, %v328, 0
  %359 = vmatprep.subr.bf16.mxu0 0
  %360 = vmatpush1.bf16.msra.mxu0 %v345
  %361 = vmatprep.subr.bf16.mxu0 0
  %362 = vmatpush1.bf16.msra.mxu0 %v346
  %363 = vmatprep.subr.bf16.mxu0 0
  %364 = vmatpush1.bf16.msra.mxu0 %v347
  %365 = vmatprep.subr.bf16.mxu0 0
  %366 = vmatpush1.bf16.msra.mxu0 %v348
  %367 = vmatprep.subr.bf16.mxu0 0
  %368 = vmatpush1.bf16.msra.mxu0 0
  %369 = vmatprep.subr.bf16.mxu0 0
  %370 = vmatpush1.bf16.msra.mxu0 0
  %371 = vmatprep.subr.bf16.mxu0 0
  %372 = vmatpush1.bf16.msra.mxu0 0
  %373 = vmatprep.subr.bf16.mxu0 0
  %374 = vmatpush1.bf16.msra.mxu0 0
  %375 = vmatprep.subr.bf16.mxu0 0
  %376 = vmatpush1.bf16.msra.mxu0 0
  %377 = vmatprep.subr.bf16.mxu0 0
  %378 = vmatpush1.bf16.msra.mxu0 0
  %379 = vmatprep.subr.bf16.mxu0 0
  %380 = vmatpush1.bf16.msra.mxu0 0
  %381 = vmatprep.subr.bf16.mxu0 0
  %382 = vmatpush1.bf16.msra.mxu0 0
  %383 = vmatprep.subr.bf16.mxu0 0
  %384 = vmatpush1.bf16.msra.mxu0 0
  %385 = vmatprep.subr.bf16.mxu0 0
  %386 = vmatpush1.bf16.msra.mxu0 0
  %387 = vmatprep.subr.bf16.mxu0 0
  %388 = vmatpush1.bf16.msra.mxu0 0
  %389 = vmatprep.subr.bf16.mxu0 0
  %390 = vmatpush1.bf16.msra.mxu0 0
  %391 = vmatprep.mubr.bf16.mxu0 0
  %392 = vmatmul.mubr.bf16.gmra.mrb[0].mxu0 %v354
  %v393 = vpop.f32.mrb[0].mxu0
  %v394 = vadd.f32 0.0, %v393
  %v395 = vpop.f32.mrb[0].mxu0
  %v396 = vpop.f32.mrb[0].mxu0
  %v397 = vadd.f32 0.0, %v396
  %v398 = vpop.f32.mrb[0].mxu0
  %399 = vmatprep.mubr.bf16.mxu0 0
  %400 = vmatmul.mubr.bf16.gmra.mrb[0].mxu0 %v357
  %v401 = vpop.f32.mrb[0].mxu0
  %v402 = vadd.f32 0.0, %v401
  %v403 = vpop.f32.mrb[0].mxu0
  %v404 = vpop.f32.mrb[0].mxu0
  %v405 = vadd.f32 0.0, %v404
  %v406 = vpop.f32.mrb[0].mxu0
  %407 = vdwg.mxu0
  %v408 = vadd.f32 %v271, %v394
  %v409 = vadd.f32 %v274, %v397
  %v410 = vadd.f32 %v279, %v402
  %v411 = vadd.f32 %v282, %v405
  %v412 = vld [vmem:[%s2] sm:$0x1]
  %v414 = vlaneseq
  %v415 = vshrl.u32 %v414, 7
  %v416 = vsub.s32 0, %v415
  %v417 = vrot.slane %v412, %v416
  %v419 = vadd.f32 %v408, %v417
  %v420 = vadd.f32 %v409, %v417
  %v421 = vadd.f32 %v410, %v417
  %v422 = vadd.f32 %v411, %v417
  %v423 = vld [vmem:[%s3] sm:$0x1]
  %v424 = vld [vmem:[%s4] sm:$0x1]
  %v425 = vadd.f32 %v419, %v420
  %v426 = vadd.f32 %v425, %v421
  %v427 = vadd.f32 %v426, %v422
  %v428 = vrot.slane %v427, 4
  %v429 = vadd.f32 %v427, %v428
  %v430 = vrot.slane %v429, 2
  %v431 = vadd.f32 %v429, %v430
  %v432 = vrot.slane %v431, 1
  %v433 = vadd.f32 %v431, %v432
  %v434 = vmul.f32 %v419, %v419
  %v435 = vmul.f32 %v420, %v420
  %v436 = vmul.f32 %v421, %v421
  %v437 = vmul.f32 %v422, %v422
  %v438 = vadd.f32 %v434, %v435
  %v439 = vadd.f32 %v438, %v436
  %v440 = vadd.f32 %v439, %v437
  %v441 = vrot.slane %v440, 4
  %v442 = vadd.f32 %v440, %v441
  %v443 = vrot.slane %v442, 2
  %v444 = vadd.f32 %v442, %v443
  %v445 = vrot.slane %v444, 1
  %v446 = vadd.f32 %v444, %v445
  %447 = vrot.lane.b32.xlu0 %v433, 8
  %v448 = vpop.permute.xlu0 %447
  %v449 = vadd.f32 %v433, %v448
  %450 = vrot.lane.b32.xlu0 %v449, 16
  %v451 = vpop.permute.xlu0 %450
  %v452 = vadd.f32 %v449, %v451
  %453 = vrot.lane.b32.xlu0 %v452, 32
  %v454 = vpop.permute.xlu0 %453
  %v455 = vadd.f32 %v452, %v454
  %456 = vrot.lane.b32.xlu0 %v455, 64
  %v457 = vpop.permute.xlu0 %456
  %v458 = vadd.f32 %v455, %v457
  %459 = vrot.lane.b32.xlu0 %v446, 8
  %v460 = vpop.permute.xlu0 %459
  %v461 = vadd.f32 %v446, %v460
  %462 = vrot.lane.b32.xlu0 %v461, 16
  %v463 = vpop.permute.xlu0 %462
  %v464 = vadd.f32 %v461, %v463
  %465 = vrot.lane.b32.xlu0 %v464, 32
  %v466 = vpop.permute.xlu0 %465
  %v467 = vadd.f32 %v464, %v466
  %468 = vrot.lane.b32.xlu0 %v467, 64
  %v469 = vpop.permute.xlu0 %468
  %v470 = vadd.f32 %v467, %v469
  %v471 = vmul.f32 %v458, 0.001953125
  %v472 = vmul.f32 %v470, 0.001953125
  %v473 = vmul.f32 %v471, %v471
  %v474 = vsub.f32 %v472, %v473
  %v475 = vmax.f32 %v474, 0.0
  %v476 = vadd.f32 %v475, 1e-05
  %v477 = vrsqrt.pop %v476
  %v478 = vmul.f32 %v423, %v477
  %v479 = vmul.f32 %v471, %v478
  %v480 = vsub.f32 %v424, %v479
  %v482 = vlaneseq
  %v483 = vshrl.u32 %v482, 7
  %v484 = vsub.s32 0, %v483
  %v485 = vrot.slane %v478, %v484
  %v487 = vmul.f32 %v419, %v485
  %v488 = vmul.f32 %v420, %v485
  %v489 = vmul.f32 %v421, %v485
  %v490 = vmul.f32 %v422, %v485
  %v492 = vlaneseq
  %v493 = vshrl.u32 %v492, 7
  %v494 = vsub.s32 0, %v493
  %v495 = vrot.slane %v480, %v494
  %v497 = vadd.f32 %v487, %v495
  %v498 = vadd.f32 %v488, %v495
  %v499 = vadd.f32 %v489, %v495
  %v500 = vadd.f32 %v490, %v495
  %v501 = vmax.f32 %v497, 0.0
  %v502 = vmax.f32 %v498, 0.0
  %v503 = vmax.f32 %v499, 0.0
  %v504 = vmax.f32 %v500, 0.0
  %505 = vst [vmem:[#allocation3 + $0x4] sm:$0x8] 0
  %506 = vst [vmem:[#allocation3 + $0x18] sm:$0x8] 0
  %507 = vst [vmem:[#allocation3 + $0x10] sm:$0x1] 0
  %508 = vst [vmem:[#allocation3 + $0x24] sm:$0x1] 0
  %v509 = vpack.c.bf16 %v502, %v501
  %v510 = vpack.c.bf16 %v504, %v503
  %v513 = vunpack.c.l.b16 %v509
  %v514 = vunpack.c.h.b16 %v509
  %v515 = vunpack.c.l.b16 %v510
  %v516 = vunpack.c.h.b16 %v510
  %v517 = vpack.c.b16 %v513, %v513
  %v518 = vpack.c.b16 %v514, %v514
  %v519 = vpack.c.b16 %v515, %v515
  %v520 = vpack.c.b16 %v516, %v516
  %525 = vst [vmem:[#allocation3 + $0x8] sm:$0xf] %v517
  %526 = vst [vmem:[#allocation3 + $0xc] sm:$0xf] %v518
  %527 = vst [vmem:[#allocation3 + $0x1c] sm:$0xf] %v519
  %528 = vst [vmem:[#allocation3 + $0x20] sm:$0xf] %v520
  %v529 = vld [vmem:[#allocation3 + $0x4] sm:$0x8]
  %v530 = vld [vmem:[#allocation3 + $0x8] sm:$0xf]
  %v531 = vld [vmem:[#allocation3 + $0xc] sm:$0x7]
  %v532 = vld [vmem:[#allocation3 + $0x18] sm:$0x8]
  %v533 = vld [vmem:[#allocation3 + $0x1c] sm:$0xf]
  %v534 = vld [vmem:[#allocation3 + $0x20] sm:$0x7]
  %v541 = vrot.slane %v529, 7
  %v542 = vrot.slane %v541, 4
  %v543 = vrot.slane %v530, 7
  %v544 = vsel %vm78, %v542, %v543
  %v545 = vrot.slane %v543, 4
  %v546 = vrot.slane %v531, 7
  %v547 = vsel %vm78, %v545, %v546
  %v548 = vrot.slane %v532, 7
  %v549 = vrot.slane %v548, 4
  %v550 = vrot.slane %v533, 7
  %v551 = vsel %vm78, %v549, %v550
  %v552 = vrot.slane %v550, 4
  %v553 = vrot.slane %v534, 7
  %v554 = vsel %vm78, %v552, %v553
  %v555 = vld [vmem:[%s5] sm:$0xf]
  %v556 = vld [vmem:[%s5 + $0x4] sm:$0xf]
  %v557 = vld [vmem:[%s5 + $0x8] sm:$0xf]
  %v558 = vld [vmem:[%s5 + $0xc] sm:$0xf]
  %v559 = vld [vmem:[%s5 + $0x10] sm:$0xf]
  %v560 = vld [vmem:[%s5 + $0x14] sm:$0xf]
  %v561 = vld [vmem:[%s5 + $0x18] sm:$0xf]
  %v562 = vld [vmem:[%s5 + $0x1c] sm:$0xf]
  %v563 = vld [vmem:[%s5 + $0x20] sm:$0xf]
  %v564 = vld [vmem:[%s5 + $0x24] sm:$0xf]
  %v565 = vld [vmem:[%s5 + $0x28] sm:$0xf]
  %v566 = vld [vmem:[%s5 + $0x2c] sm:$0xf]
  %v567 = vld [vmem:[%s5 + $0x30] sm:$0xf]
  %v568 = vld [vmem:[%s5 + $0x34] sm:$0xf]
  %v569 = vld [vmem:[%s5 + $0x38] sm:$0xf]
  %v570 = vld [vmem:[%s5 + $0x3c] sm:$0xf]
  %v571 = vld [vmem:[#allocation3 + $0xc] sm:$0xf]
  %v572 = vld [vmem:[#allocation3 + $0x20] sm:$0xf]
  %s573 = scalar_lea.vmem %s5, 64
  %v574 = vld [vmem:[%s573] sm:$0xf]
  %v575 = vld [vmem:[%s573 + $0x4] sm:$0xf]
  %v576 = vld [vmem:[%s573 + $0x8] sm:$0xf]
  %v577 = vld [vmem:[%s573 + $0xc] sm:$0xf]
  %v578 = vld [vmem:[%s573 + $0x10] sm:$0xf]
  %v579 = vld [vmem:[%s573 + $0x14] sm:$0xf]
  %v580 = vld [vmem:[%s573 + $0x18] sm:$0xf]
  %v581 = vld [vmem:[%s573 + $0x1c] sm:$0xf]
  %v582 = vld [vmem:[%s573 + $0x20] sm:$0xf]
  %v583 = vld [vmem:[%s573 + $0x24] sm:$0xf]
  %v584 = vld [vmem:[%s573 + $0x28] sm:$0xf]
  %v585 = vld [vmem:[%s573 + $0x2c] sm:$0xf]
  %v586 = vld [vmem:[%s573 + $0x30] sm:$0xf]
  %v587 = vld [vmem:[%s573 + $0x34] sm:$0xf]
  %v588 = vld [vmem:[%s573 + $0x38] sm:$0xf]
  %v589 = vld [vmem:[%s573 + $0x3c] sm:$0xf]
  %v592 = vunpack.c.l.b16 %v530
  %v593 = vunpack.c.l.b16 %v571
  %v594 = vunpack.c.l.b16 %v533
  %v595 = vunpack.c.l.b16 %v572
  %v596 = vpack.c.b16 %v593, %v592
  %v597 = vpack.c.b16 %v595, %v594
  %v616 = vunpack.c.l.b16 %v574
  %v617 = vunpack.c.l.b16 %v575
  %v618 = vunpack.c.l.b16 %v576
  %v619 = vunpack.c.l.b16 %v577
  %v620 = vunpack.c.l.b16 %v578
  %v621 = vunpack.c.l.b16 %v579
  %v622 = vunpack.c.l.b16 %v580
  %v623 = vunpack.c.l.b16 %v581
  %v624 = vunpack.c.l.b16 %v582
  %v625 = vunpack.c.l.b16 %v583
  %v626 = vunpack.c.l.b16 %v584
  %v627 = vunpack.c.l.b16 %v585
  %v628 = vunpack.c.l.b16 %v586
  %v629 = vunpack.c.l.b16 %v587
  %v630 = vunpack.c.l.b16 %v588
  %v631 = vunpack.c.l.b16 %v589
  %v632 = vpack.c.b16 %v617, %v616
  %v633 = vpack.c.b16 %v619, %v618
  %v634 = vpack.c.b16 %v621, %v620
  %v635 = vpack.c.b16 %v623, %v622
  %v636 = vpack.c.b16 %v625, %v624
  %v637 = vpack.c.b16 %v627, %v626
  %v638 = vpack.c.b16 %v629, %v628
  %v639 = vpack.c.b16 %v631, %v630
  %648 = vmatprep.subr.bf16.mxu0 0
  %649 = vmatpush1.bf16.msra.mxu0 %v632
  %650 = vmatprep.subr.bf16.mxu0 0
  %651 = vmatpush1.bf16.msra.mxu0 %v633
  %652 = vmatprep.subr.bf16.mxu0 0
  %653 = vmatpush1.bf16.msra.mxu0 %v634
  %654 = vmatprep.subr.bf16.mxu0 0
  %655 = vmatpush1.bf16.msra.mxu0 %v635
  %656 = vmatprep.subr.bf16.mxu0 0
  %657 = vmatpush1.bf16.msra.mxu0 %v636
  %658 = vmatprep.subr.bf16.mxu0 0
  %659 = vmatpush1.bf16.msra.mxu0 %v637
  %660 = vmatprep.subr.bf16.mxu0 0
  %661 = vmatpush1.bf16.msra.mxu0 %v638
  %662 = vmatprep.subr.bf16.mxu0 0
  %663 = vmatpush1.bf16.msra.mxu0 %v639
  %664 = vmatprep.subr.bf16.mxu0 0
  %665 = vmatpush1.bf16.msra.mxu0 0
  %666 = vmatprep.subr.bf16.mxu0 0
  %667 = vmatpush1.bf16.msra.mxu0 0
  %668 = vmatprep.subr.bf16.mxu0 0
  %669 = vmatpush1.bf16.msra.mxu0 0
  %670 = vmatprep.subr.bf16.mxu0 0
  %671 = vmatpush1.bf16.msra.mxu0 0
  %672 = vmatprep.subr.bf16.mxu0 0
  %673 = vmatpush1.bf16.msra.mxu0 0
  %674 = vmatprep.subr.bf16.mxu0 0
  %675 = vmatpush1.bf16.msra.mxu0 0
  %676 = vmatprep.subr.bf16.mxu0 0
  %677 = vmatpush1.bf16.msra.mxu0 0
  %678 = vmatprep.subr.bf16.mxu0 0
  %679 = vmatpush1.bf16.msra.mxu0 0
  %680 = vmatprep.mubr.bf16.mxu0 0
  %681 = vmatmul.mubr.bf16.gmra.mrb[0].mxu0 %v596
  %v682 = vpop.f32.mrb[0].mxu0
  %v683 = vadd.f32 0.0, %v682
  %v684 = vpop.f32.mrb[0].mxu0
  %v685 = vpop.f32.mrb[0].mxu0
  %v686 = vadd.f32 0.0, %v685
  %v687 = vpop.f32.mrb[0].mxu0
  %688 = vmatprep.mubr.bf16.mxu0 0
  %689 = vmatmul.mubr.bf16.gmra.mrb[0].mxu0 %v597
  %v690 = vpop.f32.mrb[0].mxu0
  %v691 = vadd.f32 0.0, %v690
  %v692 = vpop.f32.mrb[0].mxu0
  %v693 = vpop.f32.mrb[0].mxu0
  %v694 = vadd.f32 0.0, %v693
  %v695 = vpop.f32.mrb[0].mxu0
  %696 = vdwg.mxu0
  %v697 = vunpack.c.l.b16 %v544
  %v698 = vunpack.c.l.b16 %v547
  %v699 = vunpack.c.l.b16 %v551
  %v700 = vunpack.c.l.b16 %v554
  %v701 = vpack.c.b16 %v698, %v697
  %v702 = vpack.c.b16 %v700, %v699
  %v721 = vunpack.c.l.b16 %v555
  %v722 = vunpack.c.l.b16 %v556
  %v723 = vunpack.c.l.b16 %v557
  %v724 = vunpack.c.l.b16 %v558
  %v725 = vunpack.c.l.b16 %v559
  %v726 = vunpack.c.l.b16 %v560
  %v727 = vunpack.c.l.b16 %v561
  %v728 = vunpack.c.l.b16 %v562
  %v729 = vunpack.c.l.b16 %v563
  %v730 = vunpack.c.l.b16 %v564
  %v731 = vunpack.c.l.b16 %v565
  %v732 = vunpack.c.l.b16 %v566
  %v733 = vunpack.c.l.b16 %v567
  %v734 = vunpack.c.l.b16 %v568
  %v735 = vunpack.c.l.b16 %v569
  %v736 = vunpack.c.l.b16 %v570
  %v737 = vpack.c.b16 %v722, %v721
  %v738 = vpack.c.b16 %v724, %v723
  %v739 = vpack.c.b16 %v726, %v725
  %v740 = vpack.c.b16 %v728, %v727
  %v741 = vpack.c.b16 %v730, %v729
  %v742 = vpack.c.b16 %v732, %v731
  %v743 = vpack.c.b16 %v734, %v733
  %v744 = vpack.c.b16 %v736, %v735
  %753 = vmatprep.subr.bf16.mxu0 0
  %754 = vmatpush1.bf16.msra.mxu0 %v737
  %755 = vmatprep.subr.bf16.mxu0 0
  %756 = vmatpush1.bf16.msra.mxu0 %v738
  %757 = vmatprep.subr.bf16.mxu0 0
  %758 = vmatpush1.bf16.msra.mxu0 %v739
  %759 = vmatprep.subr.bf16.mxu0 0
  %760 = vmatpush1.bf16.msra.mxu0 %v740
  %761 = vmatprep.subr.bf16.mxu0 0
  %762 = vmatpush1.bf16.msra.mxu0 %v741
  %763 = vmatprep.subr.bf16.mxu0 0
  %764 = vmatpush1.bf16.msra.mxu0 %v742
  %765 = vmatprep.subr.bf16.mxu0 0
  %766 = vmatpush1.bf16.msra.mxu0 %v743
  %767 = vmatprep.subr.bf16.mxu0 0
  %768 = vmatpush1.bf16.msra.mxu0 %v744
  %769 = vmatprep.subr.bf16.mxu0 0
  %770 = vmatpush1.bf16.msra.mxu0 0
  %771 = vmatprep.subr.bf16.mxu0 0
  %772 = vmatpush1.bf16.msra.mxu0 0
  %773 = vmatprep.subr.bf16.mxu0 0
  %774 = vmatpush1.bf16.msra.mxu0 0
  %775 = vmatprep.subr.bf16.mxu0 0
  %776 = vmatpush1.bf16.msra.mxu0 0
  %777 = vmatprep.subr.bf16.mxu0 0
  %778 = vmatpush1.bf16.msra.mxu0 0
  %779 = vmatprep.subr.bf16.mxu0 0
  %780 = vmatpush1.bf16.msra.mxu0 0
  %781 = vmatprep.subr.bf16.mxu0 0
  %782 = vmatpush1.bf16.msra.mxu0 0
  %783 = vmatprep.subr.bf16.mxu0 0
  %784 = vmatpush1.bf16.msra.mxu0 0
  %785 = vmatprep.mubr.bf16.mxu0 0
  %786 = vmatmul.mubr.bf16.gmra.mrb[0].mxu0 %v701
  %v787 = vpop.f32.mrb[0].mxu0
  %v788 = vadd.f32 %v683, %v787
  %v789 = vpop.f32.mrb[0].mxu0
  %v790 = vpop.f32.mrb[0].mxu0
  %v791 = vadd.f32 %v686, %v790
  %v792 = vpop.f32.mrb[0].mxu0
  %793 = vmatprep.mubr.bf16.mxu0 0
  %794 = vmatmul.mubr.bf16.gmra.mrb[0].mxu0 %v702
  %v795 = vpop.f32.mrb[0].mxu0
  %v796 = vadd.f32 %v691, %v795
  %v797 = vpop.f32.mrb[0].mxu0
  %v798 = vpop.f32.mrb[0].mxu0
  %v799 = vadd.f32 %v694, %v798
  %v800 = vpop.f32.mrb[0].mxu0
  %801 = vdwg.mxu0
  %v802 = vld [vmem:[#allocation3 + $0x8] sm:$0xe]
  %v803 = vld [vmem:[#allocation3 + $0xc] sm:$0xf]
  %v804 = vld [vmem:[#allocation3 + $0x10] sm:$0x1]
  %v805 = vld [vmem:[#allocation3 + $0x1c] sm:$0xe]
  %v806 = vld [vmem:[#allocation3 + $0x20] sm:$0xf]
  %v807 = vld [vmem:[#allocation3 + $0x24] sm:$0x1]
  %v814 = vrot.slane %v802, 5
  %v815 = vrot.slane %v814, 4
  %v816 = vrot.slane %v803, 5
  %v817 = vsel %vm299, %v815, %v816
  %v818 = vrot.slane %v816, 4
  %v819 = vrot.slane %v804, 5
  %v820 = vsel %vm299, %v818, %v819
  %v821 = vrot.slane %v805, 5
  %v822 = vrot.slane %v821, 4
  %v823 = vrot.slane %v806, 5
  %v824 = vsel %vm299, %v822, %v823
  %v825 = vrot.slane %v823, 4
  %v826 = vrot.slane %v807, 5
  %v827 = vsel %vm299, %v825, %v826
  %s828 = scalar_lea.vmem %s5, 128
  %v829 = vld [vmem:[%s828] sm:$0xf]
  %v830 = vld [vmem:[%s828 + $0x4] sm:$0xf]
  %v831 = vld [vmem:[%s828 + $0x8] sm:$0xf]
  %v832 = vld [vmem:[%s828 + $0xc] sm:$0xf]
  %v833 = vld [vmem:[%s828 + $0x10] sm:$0xf]
  %v834 = vld [vmem:[%s828 + $0x14] sm:$0xf]
  %v835 = vld [vmem:[%s828 + $0x18] sm:$0xf]
  %v836 = vld [vmem:[%s828 + $0x1c] sm:$0xf]
  %v837 = vld [vmem:[%s828 + $0x20] sm:$0xf]
  %v838 = vld [vmem:[%s828 + $0x24] sm:$0xf]
  %v839 = vld [vmem:[%s828 + $0x28] sm:$0xf]
  %v840 = vld [vmem:[%s828 + $0x2c] sm:$0xf]
  %v841 = vld [vmem:[%s828 + $0x30] sm:$0xf]
  %v842 = vld [vmem:[%s828 + $0x34] sm:$0xf]
  %v843 = vld [vmem:[%s828 + $0x38] sm:$0xf]
  %v844 = vld [vmem:[%s828 + $0x3c] sm:$0xf]
  %v845 = vunpack.c.l.b16 %v817
  %v846 = vunpack.c.l.b16 %v820
  %v847 = vunpack.c.l.b16 %v824
  %v848 = vunpack.c.l.b16 %v827
  %v849 = vpack.c.b16 %v846, %v845
  %v850 = vpack.c.b16 %v848, %v847
  %v869 = vunpack.c.l.b16 %v829
  %v870 = vunpack.c.l.b16 %v830
  %v871 = vunpack.c.l.b16 %v831
  %v872 = vunpack.c.l.b16 %v832
  %v873 = vunpack.c.l.b16 %v833
  %v874 = vunpack.c.l.b16 %v834
  %v875 = vunpack.c.l.b16 %v835
  %v876 = vunpack.c.l.b16 %v836
  %v877 = vunpack.c.l.b16 %v837
  %v878 = vunpack.c.l.b16 %v838
  %v879 = vunpack.c.l.b16 %v839
  %v880 = vunpack.c.l.b16 %v840
  %v881 = vunpack.c.l.b16 %v841
  %v882 = vunpack.c.l.b16 %v842
  %v883 = vunpack.c.l.b16 %v843
  %v884 = vunpack.c.l.b16 %v844
  %v885 = vpack.c.b16 %v870, %v869
  %v886 = vpack.c.b16 %v872, %v871
  %v887 = vpack.c.b16 %v874, %v873
  %v888 = vpack.c.b16 %v876, %v875
  %v889 = vpack.c.b16 %v878, %v877
  %v890 = vpack.c.b16 %v880, %v879
  %v891 = vpack.c.b16 %v882, %v881
  %v892 = vpack.c.b16 %v884, %v883
  %901 = vmatprep.subr.bf16.mxu0 0
  %902 = vmatpush1.bf16.msra.mxu0 %v885
  %903 = vmatprep.subr.bf16.mxu0 0
  %904 = vmatpush1.bf16.msra.mxu0 %v886
  %905 = vmatprep.subr.bf16.mxu0 0
  %906 = vmatpush1.bf16.msra.mxu0 %v887
  %907 = vmatprep.subr.bf16.mxu0 0
  %908 = vmatpush1.bf16.msra.mxu0 %v888
  %909 = vmatprep.subr.bf16.mxu0 0
  %910 = vmatpush1.bf16.msra.mxu0 %v889
  %911 = vmatprep.subr.bf16.mxu0 0
  %912 = vmatpush1.bf16.msra.mxu0 %v890
  %913 = vmatprep.subr.bf16.mxu0 0
  %914 = vmatpush1.bf16.msra.mxu0 %v891
  %915 = vmatprep.subr.bf16.mxu0 0
  %916 = vmatpush1.bf16.msra.mxu0 %v892
  %917 = vmatprep.subr.bf16.mxu0 0
  %918 = vmatpush1.bf16.msra.mxu0 0
  %919 = vmatprep.subr.bf16.mxu0 0
  %920 = vmatpush1.bf16.msra.mxu0 0
  %921 = vmatprep.subr.bf16.mxu0 0
  %922 = vmatpush1.bf16.msra.mxu0 0
  %923 = vmatprep.subr.bf16.mxu0 0
  %924 = vmatpush1.bf16.msra.mxu0 0
  %925 = vmatprep.subr.bf16.mxu0 0
  %926 = vmatpush1.bf16.msra.mxu0 0
  %927 = vmatprep.subr.bf16.mxu0 0
  %928 = vmatpush1.bf16.msra.mxu0 0
  %929 = vmatprep.subr.bf16.mxu0 0
  %930 = vmatpush1.bf16.msra.mxu0 0
  %931 = vmatprep.subr.bf16.mxu0 0
  %932 = vmatpush1.bf16.msra.mxu0 0
  %933 = vmatprep.mubr.bf16.mxu0 0
  %934 = vmatmul.mubr.bf16.gmra.mrb[0].mxu0 %v849
  %v935 = vpop.f32.mrb[0].mxu0
  %v936 = vadd.f32 0.0, %v935
  %v937 = vpop.f32.mrb[0].mxu0
  %v938 = vpop.f32.mrb[0].mxu0
  %v939 = vadd.f32 0.0, %v938
  %v940 = vpop.f32.mrb[0].mxu0
  %941 = vmatprep.mubr.bf16.mxu0 0
  %942 = vmatmul.mubr.bf16.gmra.mrb[0].mxu0 %v850
  %v943 = vpop.f32.mrb[0].mxu0
  %v944 = vadd.f32 0.0, %v943
  %v945 = vpop.f32.mrb[0].mxu0
  %v946 = vpop.f32.mrb[0].mxu0
  %v947 = vadd.f32 0.0, %v946
  %v948 = vpop.f32.mrb[0].mxu0
  %949 = vdwg.mxu0
  %v950 = vadd.f32 %v788, %v936
  %v951 = vadd.f32 %v791, %v939
  %v952 = vadd.f32 %v796, %v944
  %v953 = vadd.f32 %v799, %v947
  %v954 = vld [vmem:[%s6] sm:$0x1]
  %v956 = vlaneseq
  %v957 = vshrl.u32 %v956, 7
  %v958 = vsub.s32 0, %v957
  %v959 = vrot.slane %v954, %v958
  %v961 = vadd.f32 %v950, %v959
  %v962 = vadd.f32 %v951, %v959
  %v963 = vadd.f32 %v952, %v959
  %v964 = vadd.f32 %v953, %v959
  %v965 = vld [vmem:[%s7] sm:$0x1]
  %v966 = vld [vmem:[%s8] sm:$0x1]
  %v967 = vadd.f32 %v961, %v962
  %v968 = vadd.f32 %v967, %v963
  %v969 = vadd.f32 %v968, %v964
  %v970 = vrot.slane %v969, 4
  %v971 = vadd.f32 %v969, %v970
  %v972 = vrot.slane %v971, 2
  %v973 = vadd.f32 %v971, %v972
  %v974 = vrot.slane %v973, 1
  %v975 = vadd.f32 %v973, %v974
  %v976 = vmul.f32 %v961, %v961
  %v977 = vmul.f32 %v962, %v962
  %v978 = vmul.f32 %v963, %v963
  %v979 = vmul.f32 %v964, %v964
  %v980 = vadd.f32 %v976, %v977
  %v981 = vadd.f32 %v980, %v978
  %v982 = vadd.f32 %v981, %v979
  %v983 = vrot.slane %v982, 4
  %v984 = vadd.f32 %v982, %v983
  %v985 = vrot.slane %v984, 2
  %v986 = vadd.f32 %v984, %v985
  %v987 = vrot.slane %v986, 1
  %v988 = vadd.f32 %v986, %v987
  %989 = vrot.lane.b32.xlu0 %v975, 8
  %v990 = vpop.permute.xlu0 %989
  %v991 = vadd.f32 %v975, %v990
  %992 = vrot.lane.b32.xlu0 %v991, 16
  %v993 = vpop.permute.xlu0 %992
  %v994 = vadd.f32 %v991, %v993
  %995 = vrot.lane.b32.xlu0 %v994, 32
  %v996 = vpop.permute.xlu0 %995
  %v997 = vadd.f32 %v994, %v996
  %998 = vrot.lane.b32.xlu0 %v997, 64
  %v999 = vpop.permute.xlu0 %998
  %v1000 = vadd.f32 %v997, %v999
  %1001 = vrot.lane.b32.xlu0 %v988, 8
  %v1002 = vpop.permute.xlu0 %1001
  %v1003 = vadd.f32 %v988, %v1002
  %1004 = vrot.lane.b32.xlu0 %v1003, 16
  %v1005 = vpop.permute.xlu0 %1004
  %v1006 = vadd.f32 %v1003, %v1005
  %1007 = vrot.lane.b32.xlu0 %v1006, 32
  %v1008 = vpop.permute.xlu0 %1007
  %v1009 = vadd.f32 %v1006, %v1008
  %1010 = vrot.lane.b32.xlu0 %v1009, 64
  %v1011 = vpop.permute.xlu0 %1010
  %v1012 = vadd.f32 %v1009, %v1011
  %v1013 = vmul.f32 %v1000, 0.001953125
  %v1014 = vmul.f32 %v1012, 0.001953125
  %v1015 = vmul.f32 %v1013, %v1013
  %v1016 = vsub.f32 %v1014, %v1015
  %v1017 = vmax.f32 %v1016, 0.0
  %v1018 = vadd.f32 %v1017, 1e-05
  %v1019 = vrsqrt.pop %v1018
  %v1020 = vmul.f32 %v965, %v1019
  %v1021 = vmul.f32 %v1013, %v1020
  %v1022 = vsub.f32 %v966, %v1021
  %v1024 = vlaneseq
  %v1025 = vshrl.u32 %v1024, 7
  %v1026 = vsub.s32 0, %v1025
  %v1027 = vrot.slane %v1020, %v1026
  %v1029 = vmul.f32 %v961, %v1027
  %v1030 = vmul.f32 %v962, %v1027
  %v1031 = vmul.f32 %v963, %v1027
  %v1032 = vmul.f32 %v964, %v1027
  %v1034 = vlaneseq
  %v1035 = vshrl.u32 %v1034, 7
  %v1036 = vsub.s32 0, %v1035
  %v1037 = vrot.slane %v1022, %v1036
  %v1039 = vadd.f32 %v1029, %v1037
  %v1040 = vadd.f32 %v1030, %v1037
  %v1041 = vadd.f32 %v1031, %v1037
  %v1042 = vadd.f32 %v1032, %v1037
  %v1043 = vmax.f32 %v1039, 0.0
  %v1044 = vmax.f32 %v1040, 0.0
  %v1045 = vmax.f32 %v1041, 0.0
  %v1046 = vmax.f32 %v1042, 0.0
  %1047 = vst [vmem:[%s9] sm:$0xff] %v1043
  %1048 = vst [vmem:[%s9 + $0x8] sm:$0xff] %v1044
  %1049 = vst [vmem:[%s9 + $0x10] sm:$0xff] %v1045
  %1050 = vst [vmem:[%s9 + $0x18] sm:$0xff] %v1046
  // Predicated region
  $region38: #{in_conv_forward.1} parent=0 // pred_check
    _
  $region39: #{in_conv_forward.1} parent=0 // pred_check_branch
    %1052 = sbr.rel (0) target = $region41
  $region40: #{in_conv_forward.1} parent=0 // pred_region
    _
  $region41: #{in_conv_forward.1} parent=0 // pred_fallthru
    _
  // Predicated region
  $region42: #{in_conv_forward.1} parent=0 // pred_check
    _
  $region43: #{in_conv_forward.1} parent=0 // pred_check_branch
    %1054 = sbr.rel (0) target = $region45
  $region44: #{in_conv_forward.1} parent=0 // pred_region
    _
  $region45: #{in_conv_forward.1} parent=0 // pred_fallthru
    _

</llo_original>
